<compile_context>
chip_gen: v6e
topology: v6e:2x2x1
jax: 0.10.0
libtpu: 0.0.40
codegen_flags: <defaults>
</compile_context>

<pallas_src>
import jax
import jax.numpy as jnp
from jax.experimental import pallas as pl
from jax.experimental.pallas import tpu as pltpu


def easn_pallas(x_nchw, params):
    wm, bm, w1, b1, w2, b2 = params      # PyTorch layouts: (Cout, Cin, K, K), (Cout,)
    N, C, H, W = x_nchw.shape
    HW = H * W
    Cp = ((C + 7) // 8) * 8              # pad channels to a full f32 sublane tile
    if Cp < 8:
        Cp = 8
    K5, K3 = 5, 3

    def prep_w(w):
        # (Cout, Cin, K, K) -> zero-pad channels to Cp -> (Cout, K*K*Cin) so the
        # whole conv is ONE MXU dot against the stacked patch matrix.
        K = w.shape[-1]
        wp = jnp.pad(w.astype(jnp.float32),
                     ((0, Cp - C), (0, Cp - C), (0, 0), (0, 0)))
        return jnp.transpose(wp, (0, 2, 3, 1)).reshape(Cp, K * K * Cp)

    def prep_b(b):
        return jnp.pad(b.astype(jnp.float32), (0, Cp - C)).reshape(Cp, 1)

    wm_s, w1_s, w2_s = prep_w(wm), prep_w(w1), prep_w(w2)
    bm_s, b1_s, b2_s = prep_b(bm), prep_b(b1), prep_b(b2)

    # Channel-padded, CHW-flat input: (N, Cp, H*W); lane axis = flattened spatial.
    xf = jnp.pad(x_nchw.reshape(N, C, HW).astype(jnp.float32),
                 ((0, 0), (0, Cp - C), (0, 0)))

    def kernel(x_ref, wm_ref, bm_ref, w1_ref, b1_ref, w2_ref, b2_ref,
               out_ref, patch_ref):
        x = x_ref[0]                                        # (Cp, HW) f32

        # ---- hoisted tap-validity masks (built once, shared by all convs) ----
        lane = jax.lax.broadcasted_iota(jnp.int32, (1, HW), 1)
        wc = lane % W
        hmask = {dw: (None if dw == 0
                      else jnp.logical_and(wc + dw >= 0, wc + dw < W))
                 for dw in range(-2, 3)}
        vmask = {dh: (None if dh == 0
                      else jnp.logical_and(lane + dh * W >= 0, lane + dh * W < HW))
                 for dh in range(-2, 3)}

        def tap_mask(dh, dw):
            m = vmask[dh]
            if hmask[dw] is not None:
                m = hmask[dw] if m is None else jnp.logical_and(m, hmask[dw])
            return m

        masks = {(dh, dw): tap_mask(dh, dw)
                 for dh in range(-2, 3) for dw in range(-2, 3)}

        def shifted(src, dh, dw):
            # result[:, h*W+w] = src[:, (h+dh)*W + (w+dw)], zero out of bounds.
            delta = dh * W + dw
            p = src if delta == 0 else pltpu.roll(src, shift=(-delta) % HW, axis=1)
            m = masks[(dh, dw)]
            return p if m is None else jnp.where(m, p, 0.0)

        def conv(src, K, w_ref, b_ref):
            # Stack the K*K masked tap windows along sublanes (8-row aligned
            # stores into VMEM scratch), then a single MXU dot:
            #   (Cp, K*K*Cp) @ (K*K*Cp, HW) -> (Cp, HW)
            half = K // 2
            t = 0
            for kh in range(K):
                for kw in range(K):
                    patch_ref[t * Cp:(t + 1) * Cp, :] = shifted(src, kh - half, kw - half)
                    t += 1
            stacked = patch_ref[0:K * K * Cp, :]
            return jnp.dot(w_ref[...], stacked,
                           preferred_element_type=jnp.float32) + b_ref[...]

        main = conv(x, K5, wm_ref, bm_ref)
        s1 = conv(x, K3, w1_ref, b1_ref)
        s1 = jnp.where(s1 > 0, s1, 0.01 * s1)               # LeakyReLU(0.01)
        s2 = conv(s1, K3, w2_ref, b2_ref)
        out_ref[0] = (main * jax.nn.sigmoid(s2) + x).astype(out_ref.dtype)

    out_flat = pl.pallas_call(
        kernel,
        grid=(N,),
        in_specs=[
            pl.BlockSpec((1, Cp, HW), lambda n: (n, 0, 0)),
            pl.BlockSpec(wm_s.shape, lambda n: (0, 0)),
            pl.BlockSpec(bm_s.shape, lambda n: (0, 0)),
            pl.BlockSpec(w1_s.shape, lambda n: (0, 0)),
            pl.BlockSpec(b1_s.shape, lambda n: (0, 0)),
            pl.BlockSpec(w2_s.shape, lambda n: (0, 0)),
            pl.BlockSpec(b2_s.shape, lambda n: (0, 0)),
        ],
        out_specs=pl.BlockSpec((1, Cp, HW), lambda n: (n, 0, 0)),
        out_shape=jax.ShapeDtypeStruct((N, Cp, HW), x_nchw.dtype),
        scratch_shapes=[pltpu.VMEM((K5 * K5 * Cp, HW), jnp.float32)],
        compiler_params=pltpu.CompilerParams(dimension_semantics=("parallel",)),
    )(xf, wm_s, bm_s, w1_s, b1_s, w2_s, b2_s)

    # Drop the padded channels; already NCHW order, no transpose needed.
    return out_flat[:, :C, :].reshape(N, C, H, W)


def easn_reference(x, params):
    """Pure-JAX reference (NCHW), mirrors the PyTorch forward."""
    wm, bm, w1, b1, w2, b2 = params

    def conv(x, w, b, pad):
        y = jax.lax.conv_general_dilated(
            x, w, window_strides=(1, 1), padding=[(pad, pad), (pad, pad)],
            dimension_numbers=('NCHW', 'OIHW', 'NCHW'))
        return y + b.reshape(1, -1, 1, 1)

    main = conv(x, wm, bm, 2)
    s = conv(x, w1, b1, 1)
    s = jnp.where(s > 0, s, 0.01 * s)
    s = conv(s, w2, b2, 1)
    return main * jax.nn.sigmoid(s) + x


if __name__ == "__main__":
    key = jax.random.PRNGKey(0)
    k = jax.random.split(key, 7)

    ch_num, N, H, W = 4, 2, 16, 16

    x = jax.random.normal(k[0], (N, ch_num, H, W), jnp.float32)

    # Deterministic synthetic parameters (shapes from EASN.__init__).
    wm = 0.1 * jax.random.normal(k[1], (ch_num, ch_num, 5, 5), jnp.float32)
    bm = 0.1 * jax.random.normal(k[2], (ch_num,), jnp.float32)
    w1 = 0.1 * jax.random.normal(k[3], (ch_num, ch_num, 3, 3), jnp.float32)
    b1 = 0.1 * jax.random.normal(k[4], (ch_num,), jnp.float32)
    w2 = 0.1 * jax.random.normal(k[5], (ch_num, ch_num, 3, 3), jnp.float32)
    b2 = 0.1 * jax.random.normal(k[6], (ch_num,), jnp.float32)
    params = (wm, bm, w1, b1, w2, b2)

    out = easn_pallas(x, params)
    out = jax.block_until_ready(out)

    ref = easn_reference(x, params)
    assert out.shape == ref.shape == x.shape
    max_err = float(jnp.max(jnp.abs(out - ref)))
    assert jnp.allclose(out, ref, atol=5e-4, rtol=5e-4), f"mismatch vs ref, max err {max_err}"

    print("KERNEL_OK")
</pallas_src>

<mosaic_0001>
module attributes {stable_mosaic.version = 11 : i64} {
  func.func @kernel(%arg0: i32, %arg1: memref<1x8x256xf32, #tpu.memory_space<vmem>>, %arg2: memref<8x200xf32, #tpu.memory_space<vmem>>, %arg3: memref<8x1xf32, #tpu.memory_space<vmem>>, %arg4: memref<8x72xf32, #tpu.memory_space<vmem>>, %arg5: memref<8x1xf32, #tpu.memory_space<vmem>>, %arg6: memref<8x72xf32, #tpu.memory_space<vmem>>, %arg7: memref<8x1xf32, #tpu.memory_space<vmem>>, %arg8: memref<1x8x256xf32, #tpu.memory_space<vmem>>, %arg9: memref<200x256xf32, #tpu.memory_space<vmem>>) attributes {dimension_semantics = [#tpu.dimension_semantics<parallel>], iteration_bounds = array<i64: 2>, scalar_prefetch = 0 : i64, scratch_operands = 1 : i64, tpu.core_type = #tpu.core_type<tc>, window_params = [{transform_indices = @transform_0, window_bounds = array<i64: 1, 8, 256>}, {pipeline_mode = #tpu.pipeline_mode<synchronous>, transform_indices = @transform_1, window_bounds = array<i64: 8, 200>}, {pipeline_mode = #tpu.pipeline_mode<synchronous>, transform_indices = @transform_2, window_bounds = array<i64: 8, 1>}, {pipeline_mode = #tpu.pipeline_mode<synchronous>, transform_indices = @transform_3, window_bounds = array<i64: 8, 72>}, {pipeline_mode = #tpu.pipeline_mode<synchronous>, transform_indices = @transform_4, window_bounds = array<i64: 8, 1>}, {pipeline_mode = #tpu.pipeline_mode<synchronous>, transform_indices = @transform_5, window_bounds = array<i64: 8, 72>}, {pipeline_mode = #tpu.pipeline_mode<synchronous>, transform_indices = @transform_6, window_bounds = array<i64: 8, 1>}, {transform_indices = @transform_7, window_bounds = array<i64: 1, 8, 256>}]} {
    %c0 = arith.constant 0 : index
    %c0_0 = arith.constant 0 : index
    %c0_1 = arith.constant 0 : index
    %0 = vector.load %arg1[%c0, %c0_0, %c0_1] : memref<1x8x256xf32, #tpu.memory_space<vmem>>, vector<1x8x256xf32>
    %1 = vector.shape_cast %0 : vector<1x8x256xf32> to vector<8x256xf32>
    %2 = tpu.iota {dimensions = array<i32: 1>} : vector<1x256xi32>
    %c16_i32 = arith.constant 16 : i32
    %c0_i32 = arith.constant 0 : i32
    %3 = arith.cmpi eq, %c16_i32, %c0_i32 : i32
    %c1_i32 = arith.constant 1 : i32
    %4 = arith.select %3, %c1_i32, %c16_i32 : i32
    %5 = vector.broadcast %4 : i32 to vector<1x256xi32>
    %6 = arith.remsi %2, %5 : vector<1x256xi32>
    %c0_i32_2 = arith.constant 0 : i32
    %7 = vector.broadcast %c0_i32_2 : i32 to vector<1x256xi32>
    %8 = arith.cmpi ne, %6, %7 : vector<1x256xi32>
    %c0_i32_3 = arith.constant 0 : i32
    %9 = vector.broadcast %c0_i32_3 : i32 to vector<1x256xi32>
    %10 = arith.cmpi slt, %6, %9 : vector<1x256xi32>
    %c0_i32_4 = arith.constant 0 : i32
    %11 = arith.cmpi slt, %4, %c0_i32_4 : i32
    %12 = vector.broadcast %11 : i1 to vector<1x256xi1>
    %13 = vector.broadcast %12 : vector<1x256xi1> to vector<1x256xi1>
    %14 = arith.xori %10, %13 : vector<1x256xi1>
    %15 = arith.andi %14, %8 : vector<1x256xi1>
    %16 = vector.broadcast %4 : i32 to vector<1x256xi32>
    %17 = arith.addi %6, %16 : vector<1x256xi32>
    %18 = arith.select %15, %17, %6 : vector<1x256xi1>, vector<1x256xi32>
    %c-2_i32 = arith.constant -2 : i32
    %19 = vector.broadcast %c-2_i32 : i32 to vector<1x256xi32>
    %20 = arith.addi %18, %19 : vector<1x256xi32>
    %c0_i32_5 = arith.constant 0 : i32
    %21 = vector.broadcast %c0_i32_5 : i32 to vector<1x256xi32>
    %22 = arith.cmpi sge, %20, %21 : vector<1x256xi32>
    %c-2_i32_6 = arith.constant -2 : i32
    %23 = vector.broadcast %c-2_i32_6 : i32 to vector<1x256xi32>
    %24 = arith.addi %18, %23 : vector<1x256xi32>
    %c16_i32_7 = arith.constant 16 : i32
    %25 = vector.broadcast %c16_i32_7 : i32 to vector<1x256xi32>
    %26 = arith.cmpi slt, %24, %25 : vector<1x256xi32>
    %27 = arith.andi %22, %26 : vector<1x256xi1>
    %c-1_i32 = arith.constant -1 : i32
    %28 = vector.broadcast %c-1_i32 : i32 to vector<1x256xi32>
    %29 = arith.addi %18, %28 : vector<1x256xi32>
    %c0_i32_8 = arith.constant 0 : i32
    %30 = vector.broadcast %c0_i32_8 : i32 to vector<1x256xi32>
    %31 = arith.cmpi sge, %29, %30 : vector<1x256xi32>
    %c-1_i32_9 = arith.constant -1 : i32
    %32 = vector.broadcast %c-1_i32_9 : i32 to vector<1x256xi32>
    %33 = arith.addi %18, %32 : vector<1x256xi32>
    %c16_i32_10 = arith.constant 16 : i32
    %34 = vector.broadcast %c16_i32_10 : i32 to vector<1x256xi32>
    %35 = arith.cmpi slt, %33, %34 : vector<1x256xi32>
    %36 = arith.andi %31, %35 : vector<1x256xi1>
    %c1_i32_11 = arith.constant 1 : i32
    %37 = vector.broadcast %c1_i32_11 : i32 to vector<1x256xi32>
    %38 = arith.addi %18, %37 : vector<1x256xi32>
    %c0_i32_12 = arith.constant 0 : i32
    %39 = vector.broadcast %c0_i32_12 : i32 to vector<1x256xi32>
    %40 = arith.cmpi sge, %38, %39 : vector<1x256xi32>
    %c1_i32_13 = arith.constant 1 : i32
    %41 = vector.broadcast %c1_i32_13 : i32 to vector<1x256xi32>
    %42 = arith.addi %18, %41 : vector<1x256xi32>
    %c16_i32_14 = arith.constant 16 : i32
    %43 = vector.broadcast %c16_i32_14 : i32 to vector<1x256xi32>
    %44 = arith.cmpi slt, %42, %43 : vector<1x256xi32>
    %45 = arith.andi %40, %44 : vector<1x256xi1>
    %c2_i32 = arith.constant 2 : i32
    %46 = vector.broadcast %c2_i32 : i32 to vector<1x256xi32>
    %47 = arith.addi %18, %46 : vector<1x256xi32>
    %c0_i32_15 = arith.constant 0 : i32
    %48 = vector.broadcast %c0_i32_15 : i32 to vector<1x256xi32>
    %49 = arith.cmpi sge, %47, %48 : vector<1x256xi32>
    %c2_i32_16 = arith.constant 2 : i32
    %50 = vector.broadcast %c2_i32_16 : i32 to vector<1x256xi32>
    %51 = arith.addi %18, %50 : vector<1x256xi32>
    %c16_i32_17 = arith.constant 16 : i32
    %52 = vector.broadcast %c16_i32_17 : i32 to vector<1x256xi32>
    %53 = arith.cmpi slt, %51, %52 : vector<1x256xi32>
    %54 = arith.andi %49, %53 : vector<1x256xi1>
    %c-32_i32 = arith.constant -32 : i32
    %55 = vector.broadcast %c-32_i32 : i32 to vector<1x256xi32>
    %56 = arith.addi %2, %55 : vector<1x256xi32>
    %c0_i32_18 = arith.constant 0 : i32
    %57 = vector.broadcast %c0_i32_18 : i32 to vector<1x256xi32>
    %58 = arith.cmpi sge, %56, %57 : vector<1x256xi32>
    %c-32_i32_19 = arith.constant -32 : i32
    %59 = vector.broadcast %c-32_i32_19 : i32 to vector<1x256xi32>
    %60 = arith.addi %2, %59 : vector<1x256xi32>
    %c256_i32 = arith.constant 256 : i32
    %61 = vector.broadcast %c256_i32 : i32 to vector<1x256xi32>
    %62 = arith.cmpi slt, %60, %61 : vector<1x256xi32>
    %63 = arith.andi %58, %62 : vector<1x256xi1>
    %c-16_i32 = arith.constant -16 : i32
    %64 = vector.broadcast %c-16_i32 : i32 to vector<1x256xi32>
    %65 = arith.addi %2, %64 : vector<1x256xi32>
    %c0_i32_20 = arith.constant 0 : i32
    %66 = vector.broadcast %c0_i32_20 : i32 to vector<1x256xi32>
    %67 = arith.cmpi sge, %65, %66 : vector<1x256xi32>
    %c-16_i32_21 = arith.constant -16 : i32
    %68 = vector.broadcast %c-16_i32_21 : i32 to vector<1x256xi32>
    %69 = arith.addi %2, %68 : vector<1x256xi32>
    %c256_i32_22 = arith.constant 256 : i32
    %70 = vector.broadcast %c256_i32_22 : i32 to vector<1x256xi32>
    %71 = arith.cmpi slt, %69, %70 : vector<1x256xi32>
    %72 = arith.andi %67, %71 : vector<1x256xi1>
    %c16_i32_23 = arith.constant 16 : i32
    %73 = vector.broadcast %c16_i32_23 : i32 to vector<1x256xi32>
    %74 = arith.addi %2, %73 : vector<1x256xi32>
    %c0_i32_24 = arith.constant 0 : i32
    %75 = vector.broadcast %c0_i32_24 : i32 to vector<1x256xi32>
    %76 = arith.cmpi sge, %74, %75 : vector<1x256xi32>
    %c16_i32_25 = arith.constant 16 : i32
    %77 = vector.broadcast %c16_i32_25 : i32 to vector<1x256xi32>
    %78 = arith.addi %2, %77 : vector<1x256xi32>
    %c256_i32_26 = arith.constant 256 : i32
    %79 = vector.broadcast %c256_i32_26 : i32 to vector<1x256xi32>
    %80 = arith.cmpi slt, %78, %79 : vector<1x256xi32>
    %81 = arith.andi %76, %80 : vector<1x256xi1>
    %c32_i32 = arith.constant 32 : i32
    %82 = vector.broadcast %c32_i32 : i32 to vector<1x256xi32>
    %83 = arith.addi %2, %82 : vector<1x256xi32>
    %c0_i32_27 = arith.constant 0 : i32
    %84 = vector.broadcast %c0_i32_27 : i32 to vector<1x256xi32>
    %85 = arith.cmpi sge, %83, %84 : vector<1x256xi32>
    %c32_i32_28 = arith.constant 32 : i32
    %86 = vector.broadcast %c32_i32_28 : i32 to vector<1x256xi32>
    %87 = arith.addi %2, %86 : vector<1x256xi32>
    %c256_i32_29 = arith.constant 256 : i32
    %88 = vector.broadcast %c256_i32_29 : i32 to vector<1x256xi32>
    %89 = arith.cmpi slt, %87, %88 : vector<1x256xi32>
    %90 = arith.andi %85, %89 : vector<1x256xi1>
    %91 = arith.andi %63, %27 : vector<1x256xi1>
    %92 = arith.andi %63, %36 : vector<1x256xi1>
    %93 = arith.andi %63, %45 : vector<1x256xi1>
    %94 = arith.andi %63, %54 : vector<1x256xi1>
    %95 = arith.andi %72, %27 : vector<1x256xi1>
    %96 = arith.andi %72, %36 : vector<1x256xi1>
    %97 = arith.andi %72, %45 : vector<1x256xi1>
    %98 = arith.andi %72, %54 : vector<1x256xi1>
    %99 = arith.andi %81, %27 : vector<1x256xi1>
    %100 = arith.andi %81, %36 : vector<1x256xi1>
    %101 = arith.andi %81, %45 : vector<1x256xi1>
    %102 = arith.andi %81, %54 : vector<1x256xi1>
    %103 = arith.andi %90, %27 : vector<1x256xi1>
    %104 = arith.andi %90, %36 : vector<1x256xi1>
    %105 = arith.andi %90, %45 : vector<1x256xi1>
    %106 = arith.andi %90, %54 : vector<1x256xi1>
    %c34_i32 = arith.constant 34 : i32
    %107 = tpu.dynamic_rotate %1 by %c34_i32 dim 1 : vector<8x256xf32>, i32 -> vector<8x256xf32>
    %cst = arith.constant 0.000000e+00 : f32
    %108 = vector.shape_cast %91 : vector<1x256xi1> to vector<1x256xi1>
    %109 = vector.broadcast %108 : vector<1x256xi1> to vector<8x256xi1>
    %110 = vector.broadcast %cst : f32 to vector<8x256xf32>
    %111 = arith.select %109, %107, %110 : vector<8x256xi1>, vector<8x256xf32>
    %c0_30 = arith.constant 0 : index
    %c0_31 = arith.constant 0 : index
    %112 = vector.load %arg9[%c0_30, %c0_31] : memref<200x256xf32, #tpu.memory_space<vmem>>, vector<8x256xf32>
    tpu.vector_store %arg9[%c0_30, %c0_31], %111 {strides = array<i32>} : memref<200x256xf32, #tpu.memory_space<vmem>>, vector<8x256xf32>,
    %c33_i32 = arith.constant 33 : i32
    %113 = tpu.dynamic_rotate %1 by %c33_i32 dim 1 : vector<8x256xf32>, i32 -> vector<8x256xf32>
    %cst_32 = arith.constant 0.000000e+00 : f32
    %114 = vector.shape_cast %92 : vector<1x256xi1> to vector<1x256xi1>
    %115 = vector.broadcast %114 : vector<1x256xi1> to vector<8x256xi1>
    %116 = vector.broadcast %cst_32 : f32 to vector<8x256xf32>
    %117 = arith.select %115, %113, %116 : vector<8x256xi1>, vector<8x256xf32>
    %c8 = arith.constant 8 : index
    %c0_33 = arith.constant 0 : index
    %118 = vector.load %arg9[%c8, %c0_33] : memref<200x256xf32, #tpu.memory_space<vmem>>, vector<8x256xf32>
    tpu.vector_store %arg9[%c8, %c0_33], %117 {strides = array<i32>} : memref<200x256xf32, #tpu.memory_space<vmem>>, vector<8x256xf32>,
    %c32_i32_34 = arith.constant 32 : i32
    %119 = tpu.dynamic_rotate %1 by %c32_i32_34 dim 1 : vector<8x256xf32>, i32 -> vector<8x256xf32>
    %cst_35 = arith.constant 0.000000e+00 : f32
    %120 = vector.shape_cast %63 : vector<1x256xi1> to vector<1x256xi1>
    %121 = vector.broadcast %120 : vector<1x256xi1> to vector<8x256xi1>
    %122 = vector.broadcast %cst_35 : f32 to vector<8x256xf32>
    %123 = arith.select %121, %119, %122 : vector<8x256xi1>, vector<8x256xf32>
    %c16 = arith.constant 16 : index
    %c0_36 = arith.constant 0 : index
    %124 = vector.load %arg9[%c16, %c0_36] : memref<200x256xf32, #tpu.memory_space<vmem>>, vector<8x256xf32>
    tpu.vector_store %arg9[%c16, %c0_36], %123 {strides = array<i32>} : memref<200x256xf32, #tpu.memory_space<vmem>>, vector<8x256xf32>,
    %c31_i32 = arith.constant 31 : i32
    %125 = tpu.dynamic_rotate %1 by %c31_i32 dim 1 : vector<8x256xf32>, i32 -> vector<8x256xf32>
    %cst_37 = arith.constant 0.000000e+00 : f32
    %126 = vector.shape_cast %93 : vector<1x256xi1> to vector<1x256xi1>
    %127 = vector.broadcast %126 : vector<1x256xi1> to vector<8x256xi1>
    %128 = vector.broadcast %cst_37 : f32 to vector<8x256xf32>
    %129 = arith.select %127, %125, %128 : vector<8x256xi1>, vector<8x256xf32>
    %c24 = arith.constant 24 : index
    %c0_38 = arith.constant 0 : index
    %130 = vector.load %arg9[%c24, %c0_38] : memref<200x256xf32, #tpu.memory_space<vmem>>, vector<8x256xf32>
    tpu.vector_store %arg9[%c24, %c0_38], %129 {strides = array<i32>} : memref<200x256xf32, #tpu.memory_space<vmem>>, vector<8x256xf32>,
    %c30_i32 = arith.constant 30 : i32
    %131 = tpu.dynamic_rotate %1 by %c30_i32 dim 1 : vector<8x256xf32>, i32 -> vector<8x256xf32>
    %cst_39 = arith.constant 0.000000e+00 : f32
    %132 = vector.shape_cast %94 : vector<1x256xi1> to vector<1x256xi1>
    %133 = vector.broadcast %132 : vector<1x256xi1> to vector<8x256xi1>
    %134 = vector.broadcast %cst_39 : f32 to vector<8x256xf32>
    %135 = arith.select %133, %131, %134 : vector<8x256xi1>, vector<8x256xf32>
    %c32 = arith.constant 32 : index
    %c0_40 = arith.constant 0 : index
    %136 = vector.load %arg9[%c32, %c0_40] : memref<200x256xf32, #tpu.memory_space<vmem>>, vector<8x256xf32>
    tpu.vector_store %arg9[%c32, %c0_40], %135 {strides = array<i32>} : memref<200x256xf32, #tpu.memory_space<vmem>>, vector<8x256xf32>,
    %c18_i32 = arith.constant 18 : i32
    %137 = tpu.dynamic_rotate %1 by %c18_i32 dim 1 : vector<8x256xf32>, i32 -> vector<8x256xf32>
    %cst_41 = arith.constant 0.000000e+00 : f32
    %138 = vector.shape_cast %95 : vector<1x256xi1> to vector<1x256xi1>
    %139 = vector.broadcast %138 : vector<1x256xi1> to vector<8x256xi1>
    %140 = vector.broadcast %cst_41 : f32 to vector<8x256xf32>
    %141 = arith.select %139, %137, %140 : vector<8x256xi1>, vector<8x256xf32>
    %c40 = arith.constant 40 : index
    %c0_42 = arith.constant 0 : index
    %142 = vector.load %arg9[%c40, %c0_42] : memref<200x256xf32, #tpu.memory_space<vmem>>, vector<8x256xf32>
    tpu.vector_store %arg9[%c40, %c0_42], %141 {strides = array<i32>} : memref<200x256xf32, #tpu.memory_space<vmem>>, vector<8x256xf32>,
    %c17_i32 = arith.constant 17 : i32
    %143 = tpu.dynamic_rotate %1 by %c17_i32 dim 1 : vector<8x256xf32>, i32 -> vector<8x256xf32>
    %cst_43 = arith.constant 0.000000e+00 : f32
    %144 = vector.shape_cast %96 : vector<1x256xi1> to vector<1x256xi1>
    %145 = vector.broadcast %144 : vector<1x256xi1> to vector<8x256xi1>
    %146 = vector.broadcast %cst_43 : f32 to vector<8x256xf32>
    %147 = arith.select %145, %143, %146 : vector<8x256xi1>, vector<8x256xf32>
    %c48 = arith.constant 48 : index
    %c0_44 = arith.constant 0 : index
    %148 = vector.load %arg9[%c48, %c0_44] : memref<200x256xf32, #tpu.memory_space<vmem>>, vector<8x256xf32>
    tpu.vector_store %arg9[%c48, %c0_44], %147 {strides = array<i32>} : memref<200x256xf32, #tpu.memory_space<vmem>>, vector<8x256xf32>,
    %c16_i32_45 = arith.constant 16 : i32
    %149 = tpu.dynamic_rotate %1 by %c16_i32_45 dim 1 : vector<8x256xf32>, i32 -> vector<8x256xf32>
    %cst_46 = arith.constant 0.000000e+00 : f32
    %150 = vector.shape_cast %72 : vector<1x256xi1> to vector<1x256xi1>
    %151 = vector.broadcast %150 : vector<1x256xi1> to vector<8x256xi1>
    %152 = vector.broadcast %cst_46 : f32 to vector<8x256xf32>
    %153 = arith.select %151, %149, %152 : vector<8x256xi1>, vector<8x256xf32>
    %c56 = arith.constant 56 : index
    %c0_47 = arith.constant 0 : index
    %154 = vector.load %arg9[%c56, %c0_47] : memref<200x256xf32, #tpu.memory_space<vmem>>, vector<8x256xf32>
    tpu.vector_store %arg9[%c56, %c0_47], %153 {strides = array<i32>} : memref<200x256xf32, #tpu.memory_space<vmem>>, vector<8x256xf32>,
    %c15_i32 = arith.constant 15 : i32
    %155 = tpu.dynamic_rotate %1 by %c15_i32 dim 1 : vector<8x256xf32>, i32 -> vector<8x256xf32>
    %cst_48 = arith.constant 0.000000e+00 : f32
    %156 = vector.shape_cast %97 : vector<1x256xi1> to vector<1x256xi1>
    %157 = vector.broadcast %156 : vector<1x256xi1> to vector<8x256xi1>
    %158 = vector.broadcast %cst_48 : f32 to vector<8x256xf32>
    %159 = arith.select %157, %155, %158 : vector<8x256xi1>, vector<8x256xf32>
    %c64 = arith.constant 64 : index
    %c0_49 = arith.constant 0 : index
    %160 = vector.load %arg9[%c64, %c0_49] : memref<200x256xf32, #tpu.memory_space<vmem>>, vector<8x256xf32>
    tpu.vector_store %arg9[%c64, %c0_49], %159 {strides = array<i32>} : memref<200x256xf32, #tpu.memory_space<vmem>>, vector<8x256xf32>,
    %c14_i32 = arith.constant 14 : i32
    %161 = tpu.dynamic_rotate %1 by %c14_i32 dim 1 : vector<8x256xf32>, i32 -> vector<8x256xf32>
    %cst_50 = arith.constant 0.000000e+00 : f32
    %162 = vector.shape_cast %98 : vector<1x256xi1> to vector<1x256xi1>
    %163 = vector.broadcast %162 : vector<1x256xi1> to vector<8x256xi1>
    %164 = vector.broadcast %cst_50 : f32 to vector<8x256xf32>
    %165 = arith.select %163, %161, %164 : vector<8x256xi1>, vector<8x256xf32>
    %c72 = arith.constant 72 : index
    %c0_51 = arith.constant 0 : index
    %166 = vector.load %arg9[%c72, %c0_51] : memref<200x256xf32, #tpu.memory_space<vmem>>, vector<8x256xf32>
    tpu.vector_store %arg9[%c72, %c0_51], %165 {strides = array<i32>} : memref<200x256xf32, #tpu.memory_space<vmem>>, vector<8x256xf32>,
    %c2_i32_52 = arith.constant 2 : i32
    %167 = tpu.dynamic_rotate %1 by %c2_i32_52 dim 1 : vector<8x256xf32>, i32 -> vector<8x256xf32>
    %cst_53 = arith.constant 0.000000e+00 : f32
    %168 = vector.shape_cast %27 : vector<1x256xi1> to vector<1x256xi1>
    %169 = vector.broadcast %168 : vector<1x256xi1> to vector<8x256xi1>
    %170 = vector.broadcast %cst_53 : f32 to vector<8x256xf32>
    %171 = arith.select %169, %167, %170 : vector<8x256xi1>, vector<8x256xf32>
    %c80 = arith.constant 80 : index
    %c0_54 = arith.constant 0 : index
    %172 = vector.load %arg9[%c80, %c0_54] : memref<200x256xf32, #tpu.memory_space<vmem>>, vector<8x256xf32>
    tpu.vector_store %arg9[%c80, %c0_54], %171 {strides = array<i32>} : memref<200x256xf32, #tpu.memory_space<vmem>>, vector<8x256xf32>,
    %c1_i32_55 = arith.constant 1 : i32
    %173 = tpu.dynamic_rotate %1 by %c1_i32_55 dim 1 : vector<8x256xf32>, i32 -> vector<8x256xf32>
    %cst_56 = arith.constant 0.000000e+00 : f32
    %174 = vector.shape_cast %36 : vector<1x256xi1> to vector<1x256xi1>
    %175 = vector.broadcast %174 : vector<1x256xi1> to vector<8x256xi1>
    %176 = vector.broadcast %cst_56 : f32 to vector<8x256xf32>
    %177 = arith.select %175, %173, %176 : vector<8x256xi1>, vector<8x256xf32>
    %c88 = arith.constant 88 : index
    %c0_57 = arith.constant 0 : index
    %178 = vector.load %arg9[%c88, %c0_57] : memref<200x256xf32, #tpu.memory_space<vmem>>, vector<8x256xf32>
    tpu.vector_store %arg9[%c88, %c0_57], %177 {strides = array<i32>} : memref<200x256xf32, #tpu.memory_space<vmem>>, vector<8x256xf32>,
    %c96 = arith.constant 96 : index
    %c0_58 = arith.constant 0 : index
    %179 = vector.load %arg9[%c96, %c0_58] : memref<200x256xf32, #tpu.memory_space<vmem>>, vector<8x256xf32>
    tpu.vector_store %arg9[%c96, %c0_58], %1 {strides = array<i32>} : memref<200x256xf32, #tpu.memory_space<vmem>>, vector<8x256xf32>,
    %c255_i32 = arith.constant 255 : i32
    %180 = tpu.dynamic_rotate %1 by %c255_i32 dim 1 : vector<8x256xf32>, i32 -> vector<8x256xf32>
    %cst_59 = arith.constant 0.000000e+00 : f32
    %181 = vector.shape_cast %45 : vector<1x256xi1> to vector<1x256xi1>
    %182 = vector.broadcast %181 : vector<1x256xi1> to vector<8x256xi1>
    %183 = vector.broadcast %cst_59 : f32 to vector<8x256xf32>
    %184 = arith.select %182, %180, %183 : vector<8x256xi1>, vector<8x256xf32>
    %c104 = arith.constant 104 : index
    %c0_60 = arith.constant 0 : index
    %185 = vector.load %arg9[%c104, %c0_60] : memref<200x256xf32, #tpu.memory_space<vmem>>, vector<8x256xf32>
    tpu.vector_store %arg9[%c104, %c0_60], %184 {strides = array<i32>} : memref<200x256xf32, #tpu.memory_space<vmem>>, vector<8x256xf32>,
    %c254_i32 = arith.constant 254 : i32
    %186 = tpu.dynamic_rotate %1 by %c254_i32 dim 1 : vector<8x256xf32>, i32 -> vector<8x256xf32>
    %cst_61 = arith.constant 0.000000e+00 : f32
    %187 = vector.shape_cast %54 : vector<1x256xi1> to vector<1x256xi1>
    %188 = vector.broadcast %187 : vector<1x256xi1> to vector<8x256xi1>
    %189 = vector.broadcast %cst_61 : f32 to vector<8x256xf32>
    %190 = arith.select %188, %186, %189 : vector<8x256xi1>, vector<8x256xf32>
    %c112 = arith.constant 112 : index
    %c0_62 = arith.constant 0 : index
    %191 = vector.load %arg9[%c112, %c0_62] : memref<200x256xf32, #tpu.memory_space<vmem>>, vector<8x256xf32>
    tpu.vector_store %arg9[%c112, %c0_62], %190 {strides = array<i32>} : memref<200x256xf32, #tpu.memory_space<vmem>>, vector<8x256xf32>,
    %c242_i32 = arith.constant 242 : i32
    %192 = tpu.dynamic_rotate %1 by %c242_i32 dim 1 : vector<8x256xf32>, i32 -> vector<8x256xf32>
    %cst_63 = arith.constant 0.000000e+00 : f32
    %193 = vector.shape_cast %99 : vector<1x256xi1> to vector<1x256xi1>
    %194 = vector.broadcast %193 : vector<1x256xi1> to vector<8x256xi1>
    %195 = vector.broadcast %cst_63 : f32 to vector<8x256xf32>
    %196 = arith.select %194, %192, %195 : vector<8x256xi1>, vector<8x256xf32>
    %c120 = arith.constant 120 : index
    %c0_64 = arith.constant 0 : index
    %197 = vector.load %arg9[%c120, %c0_64] : memref<200x256xf32, #tpu.memory_space<vmem>>, vector<8x256xf32>
    tpu.vector_store %arg9[%c120, %c0_64], %196 {strides = array<i32>} : memref<200x256xf32, #tpu.memory_space<vmem>>, vector<8x256xf32>,
    %c241_i32 = arith.constant 241 : i32
    %198 = tpu.dynamic_rotate %1 by %c241_i32 dim 1 : vector<8x256xf32>, i32 -> vector<8x256xf32>
    %cst_65 = arith.constant 0.000000e+00 : f32
    %199 = vector.shape_cast %100 : vector<1x256xi1> to vector<1x256xi1>
    %200 = vector.broadcast %199 : vector<1x256xi1> to vector<8x256xi1>
    %201 = vector.broadcast %cst_65 : f32 to vector<8x256xf32>
    %202 = arith.select %200, %198, %201 : vector<8x256xi1>, vector<8x256xf32>
    %c128 = arith.constant 128 : index
    %c0_66 = arith.constant 0 : index
    %203 = vector.load %arg9[%c128, %c0_66] : memref<200x256xf32, #tpu.memory_space<vmem>>, vector<8x256xf32>
    tpu.vector_store %arg9[%c128, %c0_66], %202 {strides = array<i32>} : memref<200x256xf32, #tpu.memory_space<vmem>>, vector<8x256xf32>,
    %c240_i32 = arith.constant 240 : i32
    %204 = tpu.dynamic_rotate %1 by %c240_i32 dim 1 : vector<8x256xf32>, i32 -> vector<8x256xf32>
    %cst_67 = arith.constant 0.000000e+00 : f32
    %205 = vector.shape_cast %81 : vector<1x256xi1> to vector<1x256xi1>
    %206 = vector.broadcast %205 : vector<1x256xi1> to vector<8x256xi1>
    %207 = vector.broadcast %cst_67 : f32 to vector<8x256xf32>
    %208 = arith.select %206, %204, %207 : vector<8x256xi1>, vector<8x256xf32>
    %c136 = arith.constant 136 : index
    %c0_68 = arith.constant 0 : index
    %209 = vector.load %arg9[%c136, %c0_68] : memref<200x256xf32, #tpu.memory_space<vmem>>, vector<8x256xf32>
    tpu.vector_store %arg9[%c136, %c0_68], %208 {strides = array<i32>} : memref<200x256xf32, #tpu.memory_space<vmem>>, vector<8x256xf32>,
    %c239_i32 = arith.constant 239 : i32
    %210 = tpu.dynamic_rotate %1 by %c239_i32 dim 1 : vector<8x256xf32>, i32 -> vector<8x256xf32>
    %cst_69 = arith.constant 0.000000e+00 : f32
    %211 = vector.shape_cast %101 : vector<1x256xi1> to vector<1x256xi1>
    %212 = vector.broadcast %211 : vector<1x256xi1> to vector<8x256xi1>
    %213 = vector.broadcast %cst_69 : f32 to vector<8x256xf32>
    %214 = arith.select %212, %210, %213 : vector<8x256xi1>, vector<8x256xf32>
    %c144 = arith.constant 144 : index
    %c0_70 = arith.constant 0 : index
    %215 = vector.load %arg9[%c144, %c0_70] : memref<200x256xf32, #tpu.memory_space<vmem>>, vector<8x256xf32>
    tpu.vector_store %arg9[%c144, %c0_70], %214 {strides = array<i32>} : memref<200x256xf32, #tpu.memory_space<vmem>>, vector<8x256xf32>,
    %c238_i32 = arith.constant 238 : i32
    %216 = tpu.dynamic_rotate %1 by %c238_i32 dim 1 : vector<8x256xf32>, i32 -> vector<8x256xf32>
    %cst_71 = arith.constant 0.000000e+00 : f32
    %217 = vector.shape_cast %102 : vector<1x256xi1> to vector<1x256xi1>
    %218 = vector.broadcast %217 : vector<1x256xi1> to vector<8x256xi1>
    %219 = vector.broadcast %cst_71 : f32 to vector<8x256xf32>
    %220 = arith.select %218, %216, %219 : vector<8x256xi1>, vector<8x256xf32>
    %c152 = arith.constant 152 : index
    %c0_72 = arith.constant 0 : index
    %221 = vector.load %arg9[%c152, %c0_72] : memref<200x256xf32, #tpu.memory_space<vmem>>, vector<8x256xf32>
    tpu.vector_store %arg9[%c152, %c0_72], %220 {strides = array<i32>} : memref<200x256xf32, #tpu.memory_space<vmem>>, vector<8x256xf32>,
    %c226_i32 = arith.constant 226 : i32
    %222 = tpu.dynamic_rotate %1 by %c226_i32 dim 1 : vector<8x256xf32>, i32 -> vector<8x256xf32>
    %cst_73 = arith.constant 0.000000e+00 : f32
    %223 = vector.shape_cast %103 : vector<1x256xi1> to vector<1x256xi1>
    %224 = vector.broadcast %223 : vector<1x256xi1> to vector<8x256xi1>
    %225 = vector.broadcast %cst_73 : f32 to vector<8x256xf32>
    %226 = arith.select %224, %222, %225 : vector<8x256xi1>, vector<8x256xf32>
    %c160 = arith.constant 160 : index
    %c0_74 = arith.constant 0 : index
    %227 = vector.load %arg9[%c160, %c0_74] : memref<200x256xf32, #tpu.memory_space<vmem>>, vector<8x256xf32>
    tpu.vector_store %arg9[%c160, %c0_74], %226 {strides = array<i32>} : memref<200x256xf32, #tpu.memory_space<vmem>>, vector<8x256xf32>,
    %c225_i32 = arith.constant 225 : i32
    %228 = tpu.dynamic_rotate %1 by %c225_i32 dim 1 : vector<8x256xf32>, i32 -> vector<8x256xf32>
    %cst_75 = arith.constant 0.000000e+00 : f32
    %229 = vector.shape_cast %104 : vector<1x256xi1> to vector<1x256xi1>
    %230 = vector.broadcast %229 : vector<1x256xi1> to vector<8x256xi1>
    %231 = vector.broadcast %cst_75 : f32 to vector<8x256xf32>
    %232 = arith.select %230, %228, %231 : vector<8x256xi1>, vector<8x256xf32>
    %c168 = arith.constant 168 : index
    %c0_76 = arith.constant 0 : index
    %233 = vector.load %arg9[%c168, %c0_76] : memref<200x256xf32, #tpu.memory_space<vmem>>, vector<8x256xf32>
    tpu.vector_store %arg9[%c168, %c0_76], %232 {strides = array<i32>} : memref<200x256xf32, #tpu.memory_space<vmem>>, vector<8x256xf32>,
    %c224_i32 = arith.constant 224 : i32
    %234 = tpu.dynamic_rotate %1 by %c224_i32 dim 1 : vector<8x256xf32>, i32 -> vector<8x256xf32>
    %cst_77 = arith.constant 0.000000e+00 : f32
    %235 = vector.shape_cast %90 : vector<1x256xi1> to vector<1x256xi1>
    %236 = vector.broadcast %235 : vector<1x256xi1> to vector<8x256xi1>
    %237 = vector.broadcast %cst_77 : f32 to vector<8x256xf32>
    %238 = arith.select %236, %234, %237 : vector<8x256xi1>, vector<8x256xf32>
    %c176 = arith.constant 176 : index
    %c0_78 = arith.constant 0 : index
    %239 = vector.load %arg9[%c176, %c0_78] : memref<200x256xf32, #tpu.memory_space<vmem>>, vector<8x256xf32>
    tpu.vector_store %arg9[%c176, %c0_78], %238 {strides = array<i32>} : memref<200x256xf32, #tpu.memory_space<vmem>>, vector<8x256xf32>,
    %c223_i32 = arith.constant 223 : i32
    %240 = tpu.dynamic_rotate %1 by %c223_i32 dim 1 : vector<8x256xf32>, i32 -> vector<8x256xf32>
    %cst_79 = arith.constant 0.000000e+00 : f32
    %241 = vector.shape_cast %105 : vector<1x256xi1> to vector<1x256xi1>
    %242 = vector.broadcast %241 : vector<1x256xi1> to vector<8x256xi1>
    %243 = vector.broadcast %cst_79 : f32 to vector<8x256xf32>
    %244 = arith.select %242, %240, %243 : vector<8x256xi1>, vector<8x256xf32>
    %c184 = arith.constant 184 : index
    %c0_80 = arith.constant 0 : index
    %245 = vector.load %arg9[%c184, %c0_80] : memref<200x256xf32, #tpu.memory_space<vmem>>, vector<8x256xf32>
    tpu.vector_store %arg9[%c184, %c0_80], %244 {strides = array<i32>} : memref<200x256xf32, #tpu.memory_space<vmem>>, vector<8x256xf32>,
    %c222_i32 = arith.constant 222 : i32
    %246 = tpu.dynamic_rotate %1 by %c222_i32 dim 1 : vector<8x256xf32>, i32 -> vector<8x256xf32>
    %cst_81 = arith.constant 0.000000e+00 : f32
    %247 = vector.shape_cast %106 : vector<1x256xi1> to vector<1x256xi1>
    %248 = vector.broadcast %247 : vector<1x256xi1> to vector<8x256xi1>
    %249 = vector.broadcast %cst_81 : f32 to vector<8x256xf32>
    %250 = arith.select %248, %246, %249 : vector<8x256xi1>, vector<8x256xf32>
    %c192 = arith.constant 192 : index
    %c0_82 = arith.constant 0 : index
    %251 = vector.load %arg9[%c192, %c0_82] : memref<200x256xf32, #tpu.memory_space<vmem>>, vector<8x256xf32>
    tpu.vector_store %arg9[%c192, %c0_82], %250 {strides = array<i32>} : memref<200x256xf32, #tpu.memory_space<vmem>>, vector<8x256xf32>,
    %c0_83 = arith.constant 0 : index
    %c0_84 = arith.constant 0 : index
    %252 = vector.load %arg9[%c0_83, %c0_84] : memref<200x256xf32, #tpu.memory_space<vmem>>, vector<200x256xf32>
    %c0_85 = arith.constant 0 : index
    %c0_86 = arith.constant 0 : index
    %253 = vector.load %arg2[%c0_85, %c0_86] : memref<8x200xf32, #tpu.memory_space<vmem>>, vector<8x200xf32>
    %cst_87 = arith.constant dense<0.000000e+00> : vector<8x256xf32>
    %254 = tpu.matmul %253, %252, %cst_87 {dimension_numbers = #tpu.dot_dimension_numbers<[1], [0], [0], [1], [0, 0, 1, 1], [], []>} : vector<8x200xf32>, vector<200x256xf32>, vector<8x256xf32> -> vector<8x256xf32>
    %c0_88 = arith.constant 0 : index
    %c0_89 = arith.constant 0 : index
    %255 = vector.load %arg3[%c0_88, %c0_89] : memref<8x1xf32, #tpu.memory_space<vmem>>, vector<8x1xf32>
    %256 = vector.broadcast %255 : vector<8x1xf32> to vector<8x256xf32>
    %257 = arith.addf %254, %256 : vector<8x256xf32>
    %c17_i32_90 = arith.constant 17 : i32
    %258 = tpu.dynamic_rotate %1 by %c17_i32_90 dim 1 : vector<8x256xf32>, i32 -> vector<8x256xf32>
    %cst_91 = arith.constant 0.000000e+00 : f32
    %259 = vector.shape_cast %96 : vector<1x256xi1> to vector<1x256xi1>
    %260 = vector.broadcast %259 : vector<1x256xi1> to vector<8x256xi1>
    %261 = vector.broadcast %cst_91 : f32 to vector<8x256xf32>
    %262 = arith.select %260, %258, %261 : vector<8x256xi1>, vector<8x256xf32>
    %c0_92 = arith.constant 0 : index
    %c0_93 = arith.constant 0 : index
    %263 = vector.load %arg9[%c0_92, %c0_93] : memref<200x256xf32, #tpu.memory_space<vmem>>, vector<8x256xf32>
    tpu.vector_store %arg9[%c0_92, %c0_93], %262 {strides = array<i32>} : memref<200x256xf32, #tpu.memory_space<vmem>>, vector<8x256xf32>,
    %c16_i32_94 = arith.constant 16 : i32
    %264 = tpu.dynamic_rotate %1 by %c16_i32_94 dim 1 : vector<8x256xf32>, i32 -> vector<8x256xf32>
    %cst_95 = arith.constant 0.000000e+00 : f32
    %265 = vector.shape_cast %72 : vector<1x256xi1> to vector<1x256xi1>
    %266 = vector.broadcast %265 : vector<1x256xi1> to vector<8x256xi1>
    %267 = vector.broadcast %cst_95 : f32 to vector<8x256xf32>
    %268 = arith.select %266, %264, %267 : vector<8x256xi1>, vector<8x256xf32>
    %c8_96 = arith.constant 8 : index
    %c0_97 = arith.constant 0 : index
    %269 = vector.load %arg9[%c8_96, %c0_97] : memref<200x256xf32, #tpu.memory_space<vmem>>, vector<8x256xf32>
    tpu.vector_store %arg9[%c8_96, %c0_97], %268 {strides = array<i32>} : memref<200x256xf32, #tpu.memory_space<vmem>>, vector<8x256xf32>,
    %c15_i32_98 = arith.constant 15 : i32
    %270 = tpu.dynamic_rotate %1 by %c15_i32_98 dim 1 : vector<8x256xf32>, i32 -> vector<8x256xf32>
    %cst_99 = arith.constant 0.000000e+00 : f32
    %271 = vector.shape_cast %97 : vector<1x256xi1> to vector<1x256xi1>
    %272 = vector.broadcast %271 : vector<1x256xi1> to vector<8x256xi1>
    %273 = vector.broadcast %cst_99 : f32 to vector<8x256xf32>
    %274 = arith.select %272, %270, %273 : vector<8x256xi1>, vector<8x256xf32>
    %c16_100 = arith.constant 16 : index
    %c0_101 = arith.constant 0 : index
    %275 = vector.load %arg9[%c16_100, %c0_101] : memref<200x256xf32, #tpu.memory_space<vmem>>, vector<8x256xf32>
    tpu.vector_store %arg9[%c16_100, %c0_101], %274 {strides = array<i32>} : memref<200x256xf32, #tpu.memory_space<vmem>>, vector<8x256xf32>,
    %c1_i32_102 = arith.constant 1 : i32
    %276 = tpu.dynamic_rotate %1 by %c1_i32_102 dim 1 : vector<8x256xf32>, i32 -> vector<8x256xf32>
    %cst_103 = arith.constant 0.000000e+00 : f32
    %277 = vector.shape_cast %36 : vector<1x256xi1> to vector<1x256xi1>
    %278 = vector.broadcast %277 : vector<1x256xi1> to vector<8x256xi1>
    %279 = vector.broadcast %cst_103 : f32 to vector<8x256xf32>
    %280 = arith.select %278, %276, %279 : vector<8x256xi1>, vector<8x256xf32>
    %c24_104 = arith.constant 24 : index
    %c0_105 = arith.constant 0 : index
    %281 = vector.load %arg9[%c24_104, %c0_105] : memref<200x256xf32, #tpu.memory_space<vmem>>, vector<8x256xf32>
    tpu.vector_store %arg9[%c24_104, %c0_105], %280 {strides = array<i32>} : memref<200x256xf32, #tpu.memory_space<vmem>>, vector<8x256xf32>,
    %c32_106 = arith.constant 32 : index
    %c0_107 = arith.constant 0 : index
    %282 = vector.load %arg9[%c32_106, %c0_107] : memref<200x256xf32, #tpu.memory_space<vmem>>, vector<8x256xf32>
    tpu.vector_store %arg9[%c32_106, %c0_107], %1 {strides = array<i32>} : memref<200x256xf32, #tpu.memory_space<vmem>>, vector<8x256xf32>,
    %c255_i32_108 = arith.constant 255 : i32
    %283 = tpu.dynamic_rotate %1 by %c255_i32_108 dim 1 : vector<8x256xf32>, i32 -> vector<8x256xf32>
    %cst_109 = arith.constant 0.000000e+00 : f32
    %284 = vector.shape_cast %45 : vector<1x256xi1> to vector<1x256xi1>
    %285 = vector.broadcast %284 : vector<1x256xi1> to vector<8x256xi1>
    %286 = vector.broadcast %cst_109 : f32 to vector<8x256xf32>
    %287 = arith.select %285, %283, %286 : vector<8x256xi1>, vector<8x256xf32>
    %c40_110 = arith.constant 40 : index
    %c0_111 = arith.constant 0 : index
    %288 = vector.load %arg9[%c40_110, %c0_111] : memref<200x256xf32, #tpu.memory_space<vmem>>, vector<8x256xf32>
    tpu.vector_store %arg9[%c40_110, %c0_111], %287 {strides = array<i32>} : memref<200x256xf32, #tpu.memory_space<vmem>>, vector<8x256xf32>,
    %c241_i32_112 = arith.constant 241 : i32
    %289 = tpu.dynamic_rotate %1 by %c241_i32_112 dim 1 : vector<8x256xf32>, i32 -> vector<8x256xf32>
    %cst_113 = arith.constant 0.000000e+00 : f32
    %290 = vector.shape_cast %100 : vector<1x256xi1> to vector<1x256xi1>
    %291 = vector.broadcast %290 : vector<1x256xi1> to vector<8x256xi1>
    %292 = vector.broadcast %cst_113 : f32 to vector<8x256xf32>
    %293 = arith.select %291, %289, %292 : vector<8x256xi1>, vector<8x256xf32>
    %c48_114 = arith.constant 48 : index
    %c0_115 = arith.constant 0 : index
    %294 = vector.load %arg9[%c48_114, %c0_115] : memref<200x256xf32, #tpu.memory_space<vmem>>, vector<8x256xf32>
    tpu.vector_store %arg9[%c48_114, %c0_115], %293 {strides = array<i32>} : memref<200x256xf32, #tpu.memory_space<vmem>>, vector<8x256xf32>,
    %c240_i32_116 = arith.constant 240 : i32
    %295 = tpu.dynamic_rotate %1 by %c240_i32_116 dim 1 : vector<8x256xf32>, i32 -> vector<8x256xf32>
    %cst_117 = arith.constant 0.000000e+00 : f32
    %296 = vector.shape_cast %81 : vector<1x256xi1> to vector<1x256xi1>
    %297 = vector.broadcast %296 : vector<1x256xi1> to vector<8x256xi1>
    %298 = vector.broadcast %cst_117 : f32 to vector<8x256xf32>
    %299 = arith.select %297, %295, %298 : vector<8x256xi1>, vector<8x256xf32>
    %c56_118 = arith.constant 56 : index
    %c0_119 = arith.constant 0 : index
    %300 = vector.load %arg9[%c56_118, %c0_119] : memref<200x256xf32, #tpu.memory_space<vmem>>, vector<8x256xf32>
    tpu.vector_store %arg9[%c56_118, %c0_119], %299 {strides = array<i32>} : memref<200x256xf32, #tpu.memory_space<vmem>>, vector<8x256xf32>,
    %c239_i32_120 = arith.constant 239 : i32
    %301 = tpu.dynamic_rotate %1 by %c239_i32_120 dim 1 : vector<8x256xf32>, i32 -> vector<8x256xf32>
    %cst_121 = arith.constant 0.000000e+00 : f32
    %302 = vector.shape_cast %101 : vector<1x256xi1> to vector<1x256xi1>
    %303 = vector.broadcast %302 : vector<1x256xi1> to vector<8x256xi1>
    %304 = vector.broadcast %cst_121 : f32 to vector<8x256xf32>
    %305 = arith.select %303, %301, %304 : vector<8x256xi1>, vector<8x256xf32>
    %c64_122 = arith.constant 64 : index
    %c0_123 = arith.constant 0 : index
    %306 = vector.load %arg9[%c64_122, %c0_123] : memref<200x256xf32, #tpu.memory_space<vmem>>, vector<8x256xf32>
    tpu.vector_store %arg9[%c64_122, %c0_123], %305 {strides = array<i32>} : memref<200x256xf32, #tpu.memory_space<vmem>>, vector<8x256xf32>,
    %c0_124 = arith.constant 0 : index
    %c0_125 = arith.constant 0 : index
    %307 = vector.load %arg9[%c0_124, %c0_125] : memref<200x256xf32, #tpu.memory_space<vmem>>, vector<72x256xf32>
    %c0_126 = arith.constant 0 : index
    %c0_127 = arith.constant 0 : index
    %308 = vector.load %arg4[%c0_126, %c0_127] : memref<8x72xf32, #tpu.memory_space<vmem>>, vector<8x72xf32>
    %cst_128 = arith.constant dense<0.000000e+00> : vector<8x256xf32>
    %309 = tpu.matmul %308, %307, %cst_128 {dimension_numbers = #tpu.dot_dimension_numbers<[1], [0], [0], [1], [0, 0, 1, 1], [], []>} : vector<8x72xf32>, vector<72x256xf32>, vector<8x256xf32> -> vector<8x256xf32>
    %c0_129 = arith.constant 0 : index
    %c0_130 = arith.constant 0 : index
    %310 = vector.load %arg5[%c0_129, %c0_130] : memref<8x1xf32, #tpu.memory_space<vmem>>, vector<8x1xf32>
    %311 = vector.broadcast %310 : vector<8x1xf32> to vector<8x256xf32>
    %312 = arith.addf %309, %311 : vector<8x256xf32>
    %cst_131 = arith.constant 0.000000e+00 : f32
    %313 = vector.broadcast %cst_131 : f32 to vector<8x256xf32>
    %314 = arith.cmpf ogt, %312, %313 : vector<8x256xf32>
    %cst_132 = arith.constant 0.00999999977 : f32
    %315 = vector.broadcast %cst_132 : f32 to vector<8x256xf32>
    %316 = arith.mulf %315, %312 : vector<8x256xf32>
    %317 = arith.select %314, %312, %316 : vector<8x256xi1>, vector<8x256xf32>
    %c17_i32_133 = arith.constant 17 : i32
    %318 = tpu.dynamic_rotate %317 by %c17_i32_133 dim 1 : vector<8x256xf32>, i32 -> vector<8x256xf32>
    %cst_134 = arith.constant 0.000000e+00 : f32
    %319 = vector.shape_cast %96 : vector<1x256xi1> to vector<1x256xi1>
    %320 = vector.broadcast %319 : vector<1x256xi1> to vector<8x256xi1>
    %321 = vector.broadcast %cst_134 : f32 to vector<8x256xf32>
    %322 = arith.select %320, %318, %321 : vector<8x256xi1>, vector<8x256xf32>
    %c0_135 = arith.constant 0 : index
    %c0_136 = arith.constant 0 : index
    %323 = vector.load %arg9[%c0_135, %c0_136] : memref<200x256xf32, #tpu.memory_space<vmem>>, vector<8x256xf32>
    tpu.vector_store %arg9[%c0_135, %c0_136], %322 {strides = array<i32>} : memref<200x256xf32, #tpu.memory_space<vmem>>, vector<8x256xf32>,
    %c16_i32_137 = arith.constant 16 : i32
    %324 = tpu.dynamic_rotate %317 by %c16_i32_137 dim 1 : vector<8x256xf32>, i32 -> vector<8x256xf32>
    %cst_138 = arith.constant 0.000000e+00 : f32
    %325 = vector.shape_cast %72 : vector<1x256xi1> to vector<1x256xi1>
    %326 = vector.broadcast %325 : vector<1x256xi1> to vector<8x256xi1>
    %327 = vector.broadcast %cst_138 : f32 to vector<8x256xf32>
    %328 = arith.select %326, %324, %327 : vector<8x256xi1>, vector<8x256xf32>
    %c8_139 = arith.constant 8 : index
    %c0_140 = arith.constant 0 : index
    %329 = vector.load %arg9[%c8_139, %c0_140] : memref<200x256xf32, #tpu.memory_space<vmem>>, vector<8x256xf32>
    tpu.vector_store %arg9[%c8_139, %c0_140], %328 {strides = array<i32>} : memref<200x256xf32, #tpu.memory_space<vmem>>, vector<8x256xf32>,
    %c15_i32_141 = arith.constant 15 : i32
    %330 = tpu.dynamic_rotate %317 by %c15_i32_141 dim 1 : vector<8x256xf32>, i32 -> vector<8x256xf32>
    %cst_142 = arith.constant 0.000000e+00 : f32
    %331 = vector.shape_cast %97 : vector<1x256xi1> to vector<1x256xi1>
    %332 = vector.broadcast %331 : vector<1x256xi1> to vector<8x256xi1>
    %333 = vector.broadcast %cst_142 : f32 to vector<8x256xf32>
    %334 = arith.select %332, %330, %333 : vector<8x256xi1>, vector<8x256xf32>
    %c16_143 = arith.constant 16 : index
    %c0_144 = arith.constant 0 : index
    %335 = vector.load %arg9[%c16_143, %c0_144] : memref<200x256xf32, #tpu.memory_space<vmem>>, vector<8x256xf32>
    tpu.vector_store %arg9[%c16_143, %c0_144], %334 {strides = array<i32>} : memref<200x256xf32, #tpu.memory_space<vmem>>, vector<8x256xf32>,
    %c1_i32_145 = arith.constant 1 : i32
    %336 = tpu.dynamic_rotate %317 by %c1_i32_145 dim 1 : vector<8x256xf32>, i32 -> vector<8x256xf32>
    %cst_146 = arith.constant 0.000000e+00 : f32
    %337 = vector.shape_cast %36 : vector<1x256xi1> to vector<1x256xi1>
    %338 = vector.broadcast %337 : vector<1x256xi1> to vector<8x256xi1>
    %339 = vector.broadcast %cst_146 : f32 to vector<8x256xf32>
    %340 = arith.select %338, %336, %339 : vector<8x256xi1>, vector<8x256xf32>
    %c24_147 = arith.constant 24 : index
    %c0_148 = arith.constant 0 : index
    %341 = vector.load %arg9[%c24_147, %c0_148] : memref<200x256xf32, #tpu.memory_space<vmem>>, vector<8x256xf32>
    tpu.vector_store %arg9[%c24_147, %c0_148], %340 {strides = array<i32>} : memref<200x256xf32, #tpu.memory_space<vmem>>, vector<8x256xf32>,
    %c32_149 = arith.constant 32 : index
    %c0_150 = arith.constant 0 : index
    %342 = vector.load %arg9[%c32_149, %c0_150] : memref<200x256xf32, #tpu.memory_space<vmem>>, vector<8x256xf32>
    tpu.vector_store %arg9[%c32_149, %c0_150], %317 {strides = array<i32>} : memref<200x256xf32, #tpu.memory_space<vmem>>, vector<8x256xf32>,
    %c255_i32_151 = arith.constant 255 : i32
    %343 = tpu.dynamic_rotate %317 by %c255_i32_151 dim 1 : vector<8x256xf32>, i32 -> vector<8x256xf32>
    %cst_152 = arith.constant 0.000000e+00 : f32
    %344 = vector.shape_cast %45 : vector<1x256xi1> to vector<1x256xi1>
    %345 = vector.broadcast %344 : vector<1x256xi1> to vector<8x256xi1>
    %346 = vector.broadcast %cst_152 : f32 to vector<8x256xf32>
    %347 = arith.select %345, %343, %346 : vector<8x256xi1>, vector<8x256xf32>
    %c40_153 = arith.constant 40 : index
    %c0_154 = arith.constant 0 : index
    %348 = vector.load %arg9[%c40_153, %c0_154] : memref<200x256xf32, #tpu.memory_space<vmem>>, vector<8x256xf32>
    tpu.vector_store %arg9[%c40_153, %c0_154], %347 {strides = array<i32>} : memref<200x256xf32, #tpu.memory_space<vmem>>, vector<8x256xf32>,
    %c241_i32_155 = arith.constant 241 : i32
    %349 = tpu.dynamic_rotate %317 by %c241_i32_155 dim 1 : vector<8x256xf32>, i32 -> vector<8x256xf32>
    %cst_156 = arith.constant 0.000000e+00 : f32
    %350 = vector.shape_cast %100 : vector<1x256xi1> to vector<1x256xi1>
    %351 = vector.broadcast %350 : vector<1x256xi1> to vector<8x256xi1>
    %352 = vector.broadcast %cst_156 : f32 to vector<8x256xf32>
    %353 = arith.select %351, %349, %352 : vector<8x256xi1>, vector<8x256xf32>
    %c48_157 = arith.constant 48 : index
    %c0_158 = arith.constant 0 : index
    %354 = vector.load %arg9[%c48_157, %c0_158] : memref<200x256xf32, #tpu.memory_space<vmem>>, vector<8x256xf32>
    tpu.vector_store %arg9[%c48_157, %c0_158], %353 {strides = array<i32>} : memref<200x256xf32, #tpu.memory_space<vmem>>, vector<8x256xf32>,
    %c240_i32_159 = arith.constant 240 : i32
    %355 = tpu.dynamic_rotate %317 by %c240_i32_159 dim 1 : vector<8x256xf32>, i32 -> vector<8x256xf32>
    %cst_160 = arith.constant 0.000000e+00 : f32
    %356 = vector.shape_cast %81 : vector<1x256xi1> to vector<1x256xi1>
    %357 = vector.broadcast %356 : vector<1x256xi1> to vector<8x256xi1>
    %358 = vector.broadcast %cst_160 : f32 to vector<8x256xf32>
    %359 = arith.select %357, %355, %358 : vector<8x256xi1>, vector<8x256xf32>
    %c56_161 = arith.constant 56 : index
    %c0_162 = arith.constant 0 : index
    %360 = vector.load %arg9[%c56_161, %c0_162] : memref<200x256xf32, #tpu.memory_space<vmem>>, vector<8x256xf32>
    tpu.vector_store %arg9[%c56_161, %c0_162], %359 {strides = array<i32>} : memref<200x256xf32, #tpu.memory_space<vmem>>, vector<8x256xf32>,
    %c239_i32_163 = arith.constant 239 : i32
    %361 = tpu.dynamic_rotate %317 by %c239_i32_163 dim 1 : vector<8x256xf32>, i32 -> vector<8x256xf32>
    %cst_164 = arith.constant 0.000000e+00 : f32
    %362 = vector.shape_cast %101 : vector<1x256xi1> to vector<1x256xi1>
    %363 = vector.broadcast %362 : vector<1x256xi1> to vector<8x256xi1>
    %364 = vector.broadcast %cst_164 : f32 to vector<8x256xf32>
    %365 = arith.select %363, %361, %364 : vector<8x256xi1>, vector<8x256xf32>
    %c64_165 = arith.constant 64 : index
    %c0_166 = arith.constant 0 : index
    %366 = vector.load %arg9[%c64_165, %c0_166] : memref<200x256xf32, #tpu.memory_space<vmem>>, vector<8x256xf32>
    tpu.vector_store %arg9[%c64_165, %c0_166], %365 {strides = array<i32>} : memref<200x256xf32, #tpu.memory_space<vmem>>, vector<8x256xf32>,
    %c0_167 = arith.constant 0 : index
    %c0_168 = arith.constant 0 : index
    %367 = vector.load %arg9[%c0_167, %c0_168] : memref<200x256xf32, #tpu.memory_space<vmem>>, vector<72x256xf32>
    %c0_169 = arith.constant 0 : index
    %c0_170 = arith.constant 0 : index
    %368 = vector.load %arg6[%c0_169, %c0_170] : memref<8x72xf32, #tpu.memory_space<vmem>>, vector<8x72xf32>
    %cst_171 = arith.constant dense<0.000000e+00> : vector<8x256xf32>
    %369 = tpu.matmul %368, %367, %cst_171 {dimension_numbers = #tpu.dot_dimension_numbers<[1], [0], [0], [1], [0, 0, 1, 1], [], []>} : vector<8x72xf32>, vector<72x256xf32>, vector<8x256xf32> -> vector<8x256xf32>
    %c0_172 = arith.constant 0 : index
    %c0_173 = arith.constant 0 : index
    %370 = vector.load %arg7[%c0_172, %c0_173] : memref<8x1xf32, #tpu.memory_space<vmem>>, vector<8x1xf32>
    %371 = vector.broadcast %370 : vector<8x1xf32> to vector<8x256xf32>
    %372 = arith.addf %369, %371 : vector<8x256xf32>
    %373 = arith.negf %372 : vector<8x256xf32>
    %374 = math.exp %373 : vector<8x256xf32>
    %cst_174 = arith.constant 1.000000e+00 : f32
    %375 = vector.broadcast %cst_174 : f32 to vector<8x256xf32>
    %376 = arith.addf %375, %374 : vector<8x256xf32>
    %377 = arith.divf %375, %376 : vector<8x256xf32>
    %378 = arith.mulf %257, %377 : vector<8x256xf32>
    %379 = arith.addf %378, %1 : vector<8x256xf32>
    %c0_175 = arith.constant 0 : index
    %c0_176 = arith.constant 0 : index
    %c0_177 = arith.constant 0 : index
    %380 = vector.load %arg8[%c0_175, %c0_176, %c0_177] : memref<1x8x256xf32, #tpu.memory_space<vmem>>, vector<1x8x256xf32>
    %381 = vector.shape_cast %380 : vector<1x8x256xf32> to vector<8x256xf32>
    %382 = vector.shape_cast %379 : vector<8x256xf32> to vector<1x8x256xf32>
    tpu.vector_store %arg8[%c0_175, %c0_176, %c0_177], %382 {strides = array<i32>} : memref<1x8x256xf32, #tpu.memory_space<vmem>>, vector<1x8x256xf32>,
    return
  }
  func.func @transform_0(%arg0: i32) -> (i32, i32, i32) {
    %c0_i32 = arith.constant 0 : i32
    %c0_i32_0 = arith.constant 0 : i32
    %c0_i32_1 = arith.constant 0 : i32
    return %arg0, %c0_i32, %c0_i32_0 : i32, i32, i32
  }
  func.func @transform_1(%arg0: i32) -> (i32, i32) {
    %c0_i32 = arith.constant 0 : i32
    %c0_i32_0 = arith.constant 0 : i32
    %c0_i32_1 = arith.constant 0 : i32
    return %c0_i32, %c0_i32_0 : i32, i32
  }
  func.func @transform_2(%arg0: i32) -> (i32, i32) {
    %c0_i32 = arith.constant 0 : i32
    %c0_i32_0 = arith.constant 0 : i32
    %c0_i32_1 = arith.constant 0 : i32
    return %c0_i32, %c0_i32_0 : i32, i32
  }
  func.func @transform_3(%arg0: i32) -> (i32, i32) {
    %c0_i32 = arith.constant 0 : i32
    %c0_i32_0 = arith.constant 0 : i32
    %c0_i32_1 = arith.constant 0 : i32
    return %c0_i32, %c0_i32_0 : i32, i32
  }
  func.func @transform_4(%arg0: i32) -> (i32, i32) {
    %c0_i32 = arith.constant 0 : i32
    %c0_i32_0 = arith.constant 0 : i32
    %c0_i32_1 = arith.constant 0 : i32
    return %c0_i32, %c0_i32_0 : i32, i32
  }
  func.func @transform_5(%arg0: i32) -> (i32, i32) {
    %c0_i32 = arith.constant 0 : i32
    %c0_i32_0 = arith.constant 0 : i32
    %c0_i32_1 = arith.constant 0 : i32
    return %c0_i32, %c0_i32_0 : i32, i32
  }
  func.func @transform_6(%arg0: i32) -> (i32, i32) {
    %c0_i32 = arith.constant 0 : i32
    %c0_i32_0 = arith.constant 0 : i32
    %c0_i32_1 = arith.constant 0 : i32
    return %c0_i32, %c0_i32_0 : i32, i32
  }
  func.func @transform_7(%arg0: i32) -> (i32, i32, i32) {
    %c0_i32 = arith.constant 0 : i32
    %c0_i32_0 = arith.constant 0 : i32
    %c0_i32_1 = arith.constant 0 : i32
    return %arg0, %c0_i32, %c0_i32_0 : i32, i32, i32
  }
}

</mosaic_0001>

<llo_original>
// kernel: tpu_custom_call.1
$region0: #{tpu_custom_call.1}
  #allocation0 [shape = 'u32[]', space=smem, size = 0x4, offset = 0x4, fixed_abs, tag = 'smem constant byte address 0x4 - core index']
  #allocation1 [shape = 'u32[144,128]{1,0:T(1,128)}', space=vmem, size = 0x12000, scoped, tag = 'internal scratch']
  #allocation2 [shape = 'f32[200,256]{1,0:T(8,128)}', space=vmem, size = 0x32000, scoped, tag = 'scratch operand']
  %s0 = inlined_call_operand.hbm [shape: f32[2,8,256], index: 0, kind: input, shape index: {}]
  %s1 = inlined_call_operand.vmem [shape: f32[8,200], index: 1, kind: input, shape index: {}]
  %s2 = inlined_call_operand.vmem [shape: f32[8,1], index: 2, kind: input, shape index: {}]
  %s3 = inlined_call_operand.vmem [shape: f32[8,72], index: 3, kind: input, shape index: {}]
  %s4 = inlined_call_operand.vmem [shape: f32[8,1], index: 4, kind: input, shape index: {}]
  %s5 = inlined_call_operand.vmem [shape: f32[8,72], index: 5, kind: input, shape index: {}]
  %s6 = inlined_call_operand.vmem [shape: f32[8,1], index: 6, kind: input, shape index: {}]
  %s7 = inlined_call_operand.hbm [shape: f32[2,8,256], index: 7, kind: output, shape index: {}]
  %s8 = sld [smem:[#allocation0]]
  $region65: #{tpu_custom_call.1} parent=0
    _
  %s10 = ssub.s32 1, %s8
  %s11 = scalar_select 0, %s10, %s8
  $region1: #{tpu_custom_call.1} parent=0
    #allocation3 [shape = 'u8[16384]{0}', space=vmem, size = 0x4000, scoped, tag = 'input window, operand 0']
    #allocation4 [shape = 's32[2]{0}', space=sflag, size = 0x8, scoped, tag = 'scoped memory for tpu_custom_call.1']
    #allocation5 [shape = 's32[2]{0}', space=sflag, size = 0x8, scoped, tag = 'scoped memory for tpu_custom_call.1']
    #allocation6 [shape = 'u8[16384]{0}', space=vmem, size = 0x4000, scoped, tag = 'output window, operand 0']
    %12 = vsyncpa [#allocation4], 0
    %s13 = scalar_lea.sflag [#allocation4], 1
    %14 = vsyncpa %s13, 0
    %15 = vsyncpa [#allocation5], 0
    %s16 = scalar_lea.sflag [#allocation5], 1
    %17 = vsyncpa %s16, 0
    loop: start=0, step=1, limit=4
    $region2: #{tpu_custom_call.1} parent=1 // loop_pre_header
      _
    $region3: #{tpu_custom_call.1} parent=1 // loop_header
      %s19 = sphi 0, %s23
      %p20 = scmp.ge.s32.totalorder %s19, 4
      %s29 = sphi 0, %s31
      %s32 = sphi 0, %s29
      %s33 = sphi 0, %s32
      %s49 = sphi 0, %s33
      %s53 = sphi 0, %s53
      %s55 = sphi 0, %s53
      %s56 = sphi 0, %s55
      %s70 = sphi 0, %s56
      %s74 = sphi 0, %s74
      %s76 = sphi 0, %s74
      %s77 = sphi 0, %s76
      %s91 = sphi 0, %s77
      %s95 = sphi 0, %s95
      %s97 = sphi 0, %s95
      %s98 = sphi 0, %s97
      %s112 = sphi 0, %s98
      %s116 = sphi 0, %s116
      %s118 = sphi 0, %s116
      %s119 = sphi 0, %s118
      %s133 = sphi 0, %s119
      %s137 = sphi 0, %s137
      %s139 = sphi 0, %s137
      %s140 = sphi 0, %s139
      %s154 = sphi 0, %s140
      %s158 = sphi 0, %s158
      %s160 = sphi 0, %s158
      %s161 = sphi 0, %s160
      %s175 = sphi 0, %s161
      %s181 = sphi 0, %s183
      %s184 = sphi 0, %s181
      %s185 = sphi 0, %s184
      %s201 = sphi 0, %s185
    $region4: #{tpu_custom_call.1} parent=1 // loop_header_branch
      %22 = sbr.rel (%p20) target = $region8
    $region5: #{tpu_custom_call.1} parent=1 // loop_body
      %s24 = ssub.s32 %s19, 1
      %s25 = ssub.s32 %s19, 2
      %s26 = sadd.s32 %s19, 1
      %s27 = ssub.s32 %s19, %s26
      %p28 = scmp.eq.s32.totalorder %s27, 0
      %s30 = sadd.s32 %s29, 1
      %s31 = scalar_select %p28, %s29, %s30
      %p34 = pneg %p28
      %p35 = scmp.eq.s32.totalorder %s19, 1
      %p36 = por %p34, %p35
      %p37 = scmp.ne.s32.totalorder %s29, %s32
      %p38 = scmp.eq.s32.totalorder %s19, 0
      %p39 = por %p37, %p38
      %p40 = scmp.ne.s32.totalorder %s29, %s32
      %p41 = scmp.eq.s32.totalorder %s24, 1
      %p42 = por %p40, %p41
      %p43 = scmp.ne.s32.totalorder %s32, %s33
      %p44 = scmp.eq.s32.totalorder %s24, 0
      %p45 = por %p43, %p44
      %p46 = scmp.ne.s32.totalorder %s32, %s33
      %p47 = scmp.eq.s32.totalorder %s25, 1
      %p48 = por %p46, %p47
      %p50 = scmp.ne.s32.totalorder %s33, %s49
      %p51 = scmp.eq.s32.totalorder %s25, 0
      %p52 = por %p50, %p51
      %s54 = sadd.s32 %s53, 1
      %p57 = scmp.eq.s32.totalorder %s19, 1
      %p58 = scmp.ne.s32.totalorder %s53, %s55
      %p59 = scmp.eq.s32.totalorder %s19, 0
      %p60 = por %p58, %p59
      %p61 = scmp.ne.s32.totalorder %s53, %s55
      %p62 = scmp.eq.s32.totalorder %s24, 1
      %p63 = por %p61, %p62
      %p64 = scmp.ne.s32.totalorder %s55, %s56
      %p65 = scmp.eq.s32.totalorder %s24, 0
      %p66 = por %p64, %p65
      %p67 = scmp.ne.s32.totalorder %s55, %s56
      %p68 = scmp.eq.s32.totalorder %s25, 1
      %p69 = por %p67, %p68
      %p71 = scmp.ne.s32.totalorder %s56, %s70
      %p72 = scmp.eq.s32.totalorder %s25, 0
      %p73 = por %p71, %p72
      %s75 = sadd.s32 %s74, 1
      %p78 = scmp.eq.s32.totalorder %s19, 1
      %p79 = scmp.ne.s32.totalorder %s74, %s76
      %p80 = scmp.eq.s32.totalorder %s19, 0
      %p81 = por %p79, %p80
      %p82 = scmp.ne.s32.totalorder %s74, %s76
      %p83 = scmp.eq.s32.totalorder %s24, 1
      %p84 = por %p82, %p83
      %p85 = scmp.ne.s32.totalorder %s76, %s77
      %p86 = scmp.eq.s32.totalorder %s24, 0
      %p87 = por %p85, %p86
      %p88 = scmp.ne.s32.totalorder %s76, %s77
      %p89 = scmp.eq.s32.totalorder %s25, 1
      %p90 = por %p88, %p89
      %p92 = scmp.ne.s32.totalorder %s77, %s91
      %p93 = scmp.eq.s32.totalorder %s25, 0
      %p94 = por %p92, %p93
      %s96 = sadd.s32 %s95, 1
      %p99 = scmp.eq.s32.totalorder %s19, 1
      %p100 = scmp.ne.s32.totalorder %s95, %s97
      %p101 = scmp.eq.s32.totalorder %s19, 0
      %p102 = por %p100, %p101
      %p103 = scmp.ne.s32.totalorder %s95, %s97
      %p104 = scmp.eq.s32.totalorder %s24, 1
      %p105 = por %p103, %p104
      %p106 = scmp.ne.s32.totalorder %s97, %s98
      %p107 = scmp.eq.s32.totalorder %s24, 0
      %p108 = por %p106, %p107
      %p109 = scmp.ne.s32.totalorder %s97, %s98
      %p110 = scmp.eq.s32.totalorder %s25, 1
      %p111 = por %p109, %p110
      %p113 = scmp.ne.s32.totalorder %s98, %s112
      %p114 = scmp.eq.s32.totalorder %s25, 0
      %p115 = por %p113, %p114
      %s117 = sadd.s32 %s116, 1
      %p120 = scmp.eq.s32.totalorder %s19, 1
      %p121 = scmp.ne.s32.totalorder %s116, %s118
      %p122 = scmp.eq.s32.totalorder %s19, 0
      %p123 = por %p121, %p122
      %p124 = scmp.ne.s32.totalorder %s116, %s118
      %p125 = scmp.eq.s32.totalorder %s24, 1
      %p126 = por %p124, %p125
      %p127 = scmp.ne.s32.totalorder %s118, %s119
      %p128 = scmp.eq.s32.totalorder %s24, 0
      %p129 = por %p127, %p128
      %p130 = scmp.ne.s32.totalorder %s118, %s119
      %p131 = scmp.eq.s32.totalorder %s25, 1
      %p132 = por %p130, %p131
      %p134 = scmp.ne.s32.totalorder %s119, %s133
      %p135 = scmp.eq.s32.totalorder %s25, 0
      %p136 = por %p134, %p135
      %s138 = sadd.s32 %s137, 1
      %p141 = scmp.eq.s32.totalorder %s19, 1
      %p142 = scmp.ne.s32.totalorder %s137, %s139
      %p143 = scmp.eq.s32.totalorder %s19, 0
      %p144 = por %p142, %p143
      %p145 = scmp.ne.s32.totalorder %s137, %s139
      %p146 = scmp.eq.s32.totalorder %s24, 1
      %p147 = por %p145, %p146
      %p148 = scmp.ne.s32.totalorder %s139, %s140
      %p149 = scmp.eq.s32.totalorder %s24, 0
      %p150 = por %p148, %p149
      %p151 = scmp.ne.s32.totalorder %s139, %s140
      %p152 = scmp.eq.s32.totalorder %s25, 1
      %p153 = por %p151, %p152
      %p155 = scmp.ne.s32.totalorder %s140, %s154
      %p156 = scmp.eq.s32.totalorder %s25, 0
      %p157 = por %p155, %p156
      %s159 = sadd.s32 %s158, 1
      %p162 = scmp.eq.s32.totalorder %s19, 1
      %p163 = scmp.ne.s32.totalorder %s158, %s160
      %p164 = scmp.eq.s32.totalorder %s19, 0
      %p165 = por %p163, %p164
      %p166 = scmp.ne.s32.totalorder %s158, %s160
      %p167 = scmp.eq.s32.totalorder %s24, 1
      %p168 = por %p166, %p167
      %p169 = scmp.ne.s32.totalorder %s160, %s161
      %p170 = scmp.eq.s32.totalorder %s24, 0
      %p171 = por %p169, %p170
      %p172 = scmp.ne.s32.totalorder %s160, %s161
      %p173 = scmp.eq.s32.totalorder %s25, 1
      %p174 = por %p172, %p173
      %p176 = scmp.ne.s32.totalorder %s161, %s175
      %p177 = scmp.eq.s32.totalorder %s25, 0
      %p178 = por %p176, %p177
      %s179 = ssub.s32 %s19, %s26
      %p180 = scmp.eq.s32.totalorder %s179, 0
      %s182 = sadd.s32 %s181, 1
      %s183 = scalar_select %p180, %s181, %s182
      %p186 = pneg %p180
      %p187 = scmp.eq.s32.totalorder %s19, 1
      %p188 = por %p186, %p187
      %p189 = scmp.ne.s32.totalorder %s181, %s184
      %p190 = scmp.eq.s32.totalorder %s19, 0
      %p191 = por %p189, %p190
      %p192 = scmp.ne.s32.totalorder %s181, %s184
      %p193 = scmp.eq.s32.totalorder %s24, 1
      %p194 = por %p192, %p193
      %p195 = scmp.ne.s32.totalorder %s184, %s185
      %p196 = scmp.eq.s32.totalorder %s24, 0
      %p197 = por %p195, %p196
      %p198 = scmp.ne.s32.totalorder %s184, %s185
      %p199 = scmp.eq.s32.totalorder %s25, 1
      %p200 = por %p198, %p199
      %p202 = scmp.ne.s32.totalorder %s185, %s201
      %p203 = scmp.eq.s32.totalorder %s25, 0
      %p204 = por %p202, %p203
      %p205 = scmp.le.s32.totalorder 1, %s19
      %p206 = scmp.lt.s32.totalorder %s19, 3
      %p207 = pnand %p205, %p206
      %p208 = pneg %p207
      // Predicated region
      $region9: #{tpu_custom_call.1} parent=5 // pred_check
        _
      $region10: #{tpu_custom_call.1} parent=5 // pred_check_branch
        %210 = sbr.rel (%p207) target = $region12
      $region11: #{tpu_custom_call.1} parent=5 // pred_region
        %s211 = ssub.s32 %s19, 1
        // Predicated region
        $region13: #{tpu_custom_call.1} parent=11 // pred_check
          %p212 = pneg %p66
        $region14: #{tpu_custom_call.1} parent=11 // pred_check_branch
          %214 = sbr.rel (%p212) target = $region16
        $region15: #{tpu_custom_call.1} parent=11 // pred_region
          _
        $region16: #{tpu_custom_call.1} parent=11 // pred_fallthru
          _
        // Predicated region
        $region17: #{tpu_custom_call.1} parent=11 // pred_check
          %p215 = pneg %p87
        $region18: #{tpu_custom_call.1} parent=11 // pred_check_branch
          %217 = sbr.rel (%p215) target = $region20
        $region19: #{tpu_custom_call.1} parent=11 // pred_region
          _
        $region20: #{tpu_custom_call.1} parent=11 // pred_fallthru
          _
        // Predicated region
        $region21: #{tpu_custom_call.1} parent=11 // pred_check
          %p218 = pneg %p108
        $region22: #{tpu_custom_call.1} parent=11 // pred_check_branch
          %220 = sbr.rel (%p218) target = $region24
        $region23: #{tpu_custom_call.1} parent=11 // pred_region
          _
        $region24: #{tpu_custom_call.1} parent=11 // pred_fallthru
          _
        // Predicated region
        $region25: #{tpu_custom_call.1} parent=11 // pred_check
          %p221 = pneg %p129
        $region26: #{tpu_custom_call.1} parent=11 // pred_check_branch
          %223 = sbr.rel (%p221) target = $region28
        $region27: #{tpu_custom_call.1} parent=11 // pred_region
          _
        $region28: #{tpu_custom_call.1} parent=11 // pred_fallthru
          _
        // Predicated region
        $region29: #{tpu_custom_call.1} parent=11 // pred_check
          %p224 = pneg %p150
        $region30: #{tpu_custom_call.1} parent=11 // pred_check_branch
          %226 = sbr.rel (%p224) target = $region32
        $region31: #{tpu_custom_call.1} parent=11 // pred_region
          _
        $region32: #{tpu_custom_call.1} parent=11 // pred_fallthru
          _
        // Predicated region
        $region33: #{tpu_custom_call.1} parent=11 // pred_check
          %p227 = pneg %p171
        $region34: #{tpu_custom_call.1} parent=11 // pred_check_branch
          %229 = sbr.rel (%p227) target = $region36
        $region35: #{tpu_custom_call.1} parent=11 // pred_region
          _
        $region36: #{tpu_custom_call.1} parent=11 // pred_fallthru
          _
      $region12: #{tpu_custom_call.1} parent=5 // pred_fallthru
        _
      %p230 = scmp.lt.s32.totalorder %s19, 2
      // Predicated region
      $region37: #{tpu_custom_call.1} parent=5 // pred_check
        %p231 = pneg %p230
      $region38: #{tpu_custom_call.1} parent=5 // pred_check_branch
        %233 = sbr.rel (%p231) target = $region40
      $region39: #{tpu_custom_call.1} parent=5 // pred_region
        // Predicated region
        $region41: #{tpu_custom_call.1} parent=39 // pred_check
          %p234 = pneg %p39
        $region42: #{tpu_custom_call.1} parent=39 // pred_check_branch
          %236 = sbr.rel (%p234) target = $region44
        $region43: #{tpu_custom_call.1} parent=39 // pred_region
          %s237 = sand.u32 %s29, 1
          %s238 = scalar_lea.sflag [#allocation4], %s237
          %s239 = sand.u32 %s29, 1
          %s240 = smul.addr %s239, 16
          %s241 = scalar_lea.vmem [#allocation3], %s240
          %s243 = ssub.s32 256, 256
          %244 = vsyncadd %s238, %s243
          %s245 = smul.addr %s19, 2
          %s246 = smul.addr %s245, 128
          %s247 = scalar_lea.hbm %s0, %s246
          %s249 = sshll.u32 %s241, 4
          %s250 = int_to_ptr.vmem [resolvable:$true] %s249
          %252 = dma.hbm_to_vmem [thread:$0]  %s247, 256, %s250, %s238
        $region44: #{tpu_custom_call.1} parent=39 // pred_fallthru
          _
      $region40: #{tpu_custom_call.1} parent=5 // pred_fallthru
        _
      %p253 = scmp.le.s32.totalorder 1, %s19
      %p254 = scmp.lt.s32.totalorder %s19, 3
      %p255 = pnand %p253, %p254
      %p256 = pneg %p255
      // Predicated region
      $region45: #{tpu_custom_call.1} parent=5 // pred_check
        _
      $region46: #{tpu_custom_call.1} parent=5 // pred_check_branch
        %258 = sbr.rel (%p255) target = $region48
      $region47: #{tpu_custom_call.1} parent=5 // pred_region
        %s259 = ssub.s32 %s19, 1
        %s260 = sand.u32 %s32, 1
        %s261 = scalar_lea.sflag [#allocation4], %s260
        %s262 = sand.u32 %s32, 1
        %s263 = smul.addr %s262, 16
        %s264 = scalar_lea.vmem [#allocation3], %s263
        // Predicated region
        $region49: #{tpu_custom_call.1} parent=47 // pred_check
          %p265 = pneg %p45
        $region50: #{tpu_custom_call.1} parent=47 // pred_check_branch
          %267 = sbr.rel (%p265) target = $region52
        $region51: #{tpu_custom_call.1} parent=47 // pred_region
          %268 = dma.done %s261, 256
        $region52: #{tpu_custom_call.1} parent=47 // pred_fallthru
          _
        %s269 = sand.u32 %s32, 1
        %s270 = scalar_lea.sflag [#allocation4], %s269
        %s271 = sand.u32 %s32, 1
        %s272 = smul.addr %s271, 16
        %s273 = scalar_lea.vmem [#allocation3], %s272
        %p274 = pneg %p45
        %p275 = pneg %p42
        %p276 = pneg %p66
        %p277 = pneg %p63
        %p278 = pneg %p87
        %p279 = pneg %p84
        %p280 = pneg %p108
        %p281 = pneg %p105
        %p282 = pneg %p129
        %p283 = pneg %p126
        %p284 = pneg %p150
        %p285 = pneg %p147
        %p286 = pneg %p171
        %p287 = pneg %p168
        %p288 = pneg %p197
        %p289 = pneg %p194
        %s290 = sand.u32 %s184, 1
        %s291 = scalar_lea.sflag [#allocation5], %s290
        %s292 = sand.u32 %s184, 1
        %s293 = smul.addr %s292, 16
        %s294 = scalar_lea.vmem [#allocation6], %s293
        %v295 = vld [vmem:[%s264] sm:$0xff]
        %v296 = vld [vmem:[%s264 + $0x8] sm:$0xff]
        %v297 = vlaneseq
        %v298 = vand.u32 %v297, 127
        %v299 = vadd.s32 %v298, 128
        %vm300 = vcmp.lt.s32.totalorder %v298, 0
        %v301 = vsub.s32 0, %v298
        %v302 = vsel %vm300, %v301, %v298
        %v303 = vshrl.u32 %v302, 4
        %v304 = vand.u32 %v302, 15
        %v305 = vsub.s32 0, %v304
        %v306 = vsel %vm300, %v305, %v304
        %vm307 = vcmp.lt.s32.totalorder %v299, 0
        %v308 = vsub.s32 0, %v299
        %v309 = vsel %vm307, %v308, %v299
        %v310 = vshrl.u32 %v309, 4
        %v311 = vand.u32 %v309, 15
        %v312 = vsub.s32 0, %v311
        %v313 = vsel %vm307, %v312, %v311
        %vm314 = vcmp.ne.s32.totalorder %v306, 0
        %vm315 = vcmp.ne.s32.totalorder %v313, 0
        %vm316 = vcmp.lt.s32.totalorder %v306, 0
        %vm317 = vcmp.lt.s32.totalorder %v313, 0
        %vm318 = vmand %vm316, %vm314
        %vm319 = vmand %vm317, %vm315
        %v320 = vadd.s32 %v306, 16
        %v321 = vadd.s32 %v313, 16
        %v322 = vsel %vm318, %v320, %v306
        %v323 = vsel %vm319, %v321, %v313
        %v324 = vadd.s32 %v322, 4294967294
        %v325 = vadd.s32 %v323, 4294967294
        %vm326 = vcmp.ge.s32.totalorder %v324, 0
        %vm327 = vcmp.ge.s32.totalorder %v325, 0
        %vm328 = vcmp.lt.s32.totalorder %v324, 16
        %vm329 = vcmp.lt.s32.totalorder %v325, 16
        %vm330 = vmand %vm326, %vm328
        %vm331 = vmand %vm327, %vm329
        %v332 = vadd.s32 %v322, 4294967295
        %v333 = vadd.s32 %v323, 4294967295
        %vm334 = vcmp.ge.s32.totalorder %v332, 0
        %vm335 = vcmp.ge.s32.totalorder %v333, 0
        %vm336 = vcmp.lt.s32.totalorder %v332, 16
        %vm337 = vcmp.lt.s32.totalorder %v333, 16
        %vm338 = vmand %vm334, %vm336
        %vm339 = vmand %vm335, %vm337
        %v340 = vadd.s32 %v322, 1
        %v341 = vadd.s32 %v323, 1
        %vm342 = vcmp.ge.s32.totalorder %v340, 0
        %vm343 = vcmp.ge.s32.totalorder %v341, 0
        %vm344 = vcmp.lt.s32.totalorder %v340, 16
        %vm345 = vcmp.lt.s32.totalorder %v341, 16
        %vm346 = vmand %vm342, %vm344
        %vm347 = vmand %vm343, %vm345
        %v348 = vadd.s32 %v322, 2
        %v349 = vadd.s32 %v323, 2
        %vm350 = vcmp.ge.s32.totalorder %v348, 0
        %vm351 = vcmp.ge.s32.totalorder %v349, 0
        %vm352 = vcmp.lt.s32.totalorder %v348, 16
        %vm353 = vcmp.lt.s32.totalorder %v349, 16
        %vm354 = vmand %vm350, %vm352
        %vm355 = vmand %vm351, %vm353
        %v356 = vadd.s32 %v298, 4294967264
        %v357 = vadd.s32 %v299, 4294967264
        %vm358 = vcmp.ge.s32.totalorder %v356, 0
        %vm359 = vcmp.ge.s32.totalorder %v357, 0
        %vm360 = vcmp.lt.s32.totalorder %v356, 256
        %vm361 = vcmp.lt.s32.totalorder %v357, 256
        %vm362 = vmand %vm358, %vm360
        %vm363 = vmand %vm359, %vm361
        %v364 = vadd.s32 %v298, 4294967280
        %v365 = vadd.s32 %v299, 4294967280
        %vm366 = vcmp.ge.s32.totalorder %v364, 0
        %vm367 = vcmp.ge.s32.totalorder %v365, 0
        %vm368 = vcmp.lt.s32.totalorder %v364, 256
        %vm369 = vcmp.lt.s32.totalorder %v365, 256
        %vm370 = vmand %vm366, %vm368
        %vm371 = vmand %vm367, %vm369
        %v372 = vadd.s32 %v298, 16
        %v373 = vadd.s32 %v299, 16
        %vm374 = vcmp.ge.s32.totalorder %v372, 0
        %vm375 = vcmp.ge.s32.totalorder %v373, 0
        %vm376 = vcmp.lt.s32.totalorder %v372, 256
        %vm377 = vcmp.lt.s32.totalorder %v373, 256
        %vm378 = vmand %vm374, %vm376
        %vm379 = vmand %vm375, %vm377
        %v380 = vadd.s32 %v298, 32
        %v381 = vadd.s32 %v299, 32
        %vm382 = vcmp.ge.s32.totalorder %v380, 0
        %vm383 = vcmp.ge.s32.totalorder %v381, 0
        %vm384 = vcmp.lt.s32.totalorder %v380, 256
        %vm385 = vcmp.lt.s32.totalorder %v381, 256
        %vm386 = vmand %vm382, %vm384
        %vm387 = vmand %vm383, %vm385
        %vm388 = vmand %vm362, %vm330
        %vm389 = vmand %vm363, %vm331
        %vm390 = vmand %vm362, %vm338
        %vm391 = vmand %vm363, %vm339
        %vm392 = vmand %vm362, %vm346
        %vm393 = vmand %vm363, %vm347
        %vm394 = vmand %vm362, %vm354
        %vm395 = vmand %vm363, %vm355
        %vm396 = vmand %vm370, %vm330
        %vm397 = vmand %vm371, %vm331
        %vm398 = vmand %vm370, %vm338
        %vm399 = vmand %vm371, %vm339
        %vm400 = vmand %vm370, %vm346
        %vm401 = vmand %vm371, %vm347
        %vm402 = vmand %vm370, %vm354
        %vm403 = vmand %vm371, %vm355
        %vm404 = vmand %vm378, %vm330
        %vm405 = vmand %vm379, %vm331
        %vm406 = vmand %vm378, %vm338
        %vm407 = vmand %vm379, %vm339
        %vm408 = vmand %vm378, %vm346
        %vm409 = vmand %vm379, %vm347
        %vm410 = vmand %vm378, %vm354
        %vm411 = vmand %vm379, %vm355
        %vm412 = vmand %vm386, %vm330
        %vm413 = vmand %vm387, %vm331
        %vm414 = vmand %vm386, %vm338
        %vm415 = vmand %vm387, %vm339
        %vm416 = vmand %vm386, %vm346
        %vm417 = vmand %vm387, %vm347
        %vm418 = vmand %vm386, %vm354
        %vm419 = vmand %vm387, %vm355
        %420 = vrot.lane.b32.xlu0 %v295, 34
        %v421 = vpop.permute.xlu0 %420
        %422 = vrot.lane.b32.xlu0 %v296, 34
        %v423 = vpop.permute.xlu0 %422
        %vm424 = vcmp.lt.s32.totalorder %v298, 34
        %v425 = vsel %vm424, %v421, %v423
        %v426 = vsel %vm424, %v423, %v421
        %v427 = vsel %vm388, 1, 0
        %v428 = vsel %vm389, 1, 0
        %vm429 = vcmp.eq.s32.totalorder %v427, 1
        %vm430 = vcmp.eq.s32.totalorder %v428, 1
        %v431 = vsel %vm429, %v426, 0.0
        %v432 = vsel %vm430, %v425, 0.0
        %433 = vst [vmem:[#allocation2] sm:$0xff] %v431
        %434 = vst [vmem:[#allocation2 + $0x8] sm:$0xff] %v432
        %435 = vrot.lane.b32.xlu0 %v295, 33
        %v436 = vpop.permute.xlu0 %435
        %437 = vrot.lane.b32.xlu0 %v296, 33
        %v438 = vpop.permute.xlu0 %437
        %vm439 = vcmp.lt.s32.totalorder %v298, 33
        %v440 = vsel %vm439, %v436, %v438
        %v441 = vsel %vm439, %v438, %v436
        %v442 = vsel %vm390, 1, 0
        %v443 = vsel %vm391, 1, 0
        %vm444 = vcmp.eq.s32.totalorder %v442, 1
        %vm445 = vcmp.eq.s32.totalorder %v443, 1
        %v446 = vsel %vm444, %v441, 0.0
        %v447 = vsel %vm445, %v440, 0.0
        %448 = vst [vmem:[#allocation2 + $0x10] sm:$0xff] %v446
        %449 = vst [vmem:[#allocation2 + $0x18] sm:$0xff] %v447
        %450 = vrot.lane.b32.xlu0 %v295, 32
        %v451 = vpop.permute.xlu0 %450
        %452 = vrot.lane.b32.xlu0 %v296, 32
        %v453 = vpop.permute.xlu0 %452
        %vm454 = vcmp.lt.s32.totalorder %v298, 32
        %v455 = vsel %vm454, %v451, %v453
        %v456 = vsel %vm454, %v453, %v451
        %v457 = vsel %vm362, 1, 0
        %v458 = vsel %vm363, 1, 0
        %vm459 = vcmp.eq.s32.totalorder %v457, 1
        %vm460 = vcmp.eq.s32.totalorder %v458, 1
        %v461 = vsel %vm459, %v456, 0.0
        %v462 = vsel %vm460, %v455, 0.0
        %463 = vst [vmem:[#allocation2 + $0x20] sm:$0xff] %v461
        %464 = vst [vmem:[#allocation2 + $0x28] sm:$0xff] %v462
        %465 = vrot.lane.b32.xlu0 %v295, 31
        %v466 = vpop.permute.xlu0 %465
        %467 = vrot.lane.b32.xlu0 %v296, 31
        %v468 = vpop.permute.xlu0 %467
        %vm469 = vcmp.lt.s32.totalorder %v298, 31
        %v470 = vsel %vm469, %v466, %v468
        %v471 = vsel %vm469, %v468, %v466
        %v472 = vsel %vm392, 1, 0
        %v473 = vsel %vm393, 1, 0
        %vm474 = vcmp.eq.s32.totalorder %v472, 1
        %vm475 = vcmp.eq.s32.totalorder %v473, 1
        %v476 = vsel %vm474, %v471, 0.0
        %v477 = vsel %vm475, %v470, 0.0
        %478 = vst [vmem:[#allocation2 + $0x30] sm:$0xff] %v476
        %479 = vst [vmem:[#allocation2 + $0x38] sm:$0xff] %v477
        %480 = vrot.lane.b32.xlu0 %v295, 30
        %v481 = vpop.permute.xlu0 %480
        %482 = vrot.lane.b32.xlu0 %v296, 30
        %v483 = vpop.permute.xlu0 %482
        %vm484 = vcmp.lt.s32.totalorder %v298, 30
        %v485 = vsel %vm484, %v481, %v483
        %v486 = vsel %vm484, %v483, %v481
        %v487 = vsel %vm394, 1, 0
        %v488 = vsel %vm395, 1, 0
        %vm489 = vcmp.eq.s32.totalorder %v487, 1
        %vm490 = vcmp.eq.s32.totalorder %v488, 1
        %v491 = vsel %vm489, %v486, 0.0
        %v492 = vsel %vm490, %v485, 0.0
        %493 = vst [vmem:[#allocation2 + $0x40] sm:$0xff] %v491
        %494 = vst [vmem:[#allocation2 + $0x48] sm:$0xff] %v492
        %495 = vrot.lane.b32.xlu0 %v295, 18
        %v496 = vpop.permute.xlu0 %495
        %497 = vrot.lane.b32.xlu0 %v296, 18
        %v498 = vpop.permute.xlu0 %497
        %vm499 = vcmp.lt.s32.totalorder %v298, 18
        %v500 = vsel %vm499, %v496, %v498
        %v501 = vsel %vm499, %v498, %v496
        %v502 = vsel %vm396, 1, 0
        %v503 = vsel %vm397, 1, 0
        %vm504 = vcmp.eq.s32.totalorder %v502, 1
        %vm505 = vcmp.eq.s32.totalorder %v503, 1
        %v506 = vsel %vm504, %v501, 0.0
        %v507 = vsel %vm505, %v500, 0.0
        %508 = vst [vmem:[#allocation2 + $0x50] sm:$0xff] %v506
        %509 = vst [vmem:[#allocation2 + $0x58] sm:$0xff] %v507
        %510 = vrot.lane.b32.xlu0 %v295, 17
        %v511 = vpop.permute.xlu0 %510
        %512 = vrot.lane.b32.xlu0 %v296, 17
        %v513 = vpop.permute.xlu0 %512
        %vm514 = vcmp.lt.s32.totalorder %v298, 17
        %v515 = vsel %vm514, %v511, %v513
        %v516 = vsel %vm514, %v513, %v511
        %v517 = vsel %vm398, 1, 0
        %v518 = vsel %vm399, 1, 0
        %vm519 = vcmp.eq.s32.totalorder %v517, 1
        %vm520 = vcmp.eq.s32.totalorder %v518, 1
        %v521 = vsel %vm519, %v516, 0.0
        %v522 = vsel %vm520, %v515, 0.0
        %523 = vst [vmem:[#allocation2 + $0x60] sm:$0xff] %v521
        %524 = vst [vmem:[#allocation2 + $0x68] sm:$0xff] %v522
        %525 = vrot.lane.b32.xlu0 %v295, 16
        %v526 = vpop.permute.xlu0 %525
        %527 = vrot.lane.b32.xlu0 %v296, 16
        %v528 = vpop.permute.xlu0 %527
        %vm529 = vcmp.lt.s32.totalorder %v298, 16
        %v530 = vsel %vm529, %v526, %v528
        %v531 = vsel %vm529, %v528, %v526
        %v532 = vsel %vm370, 1, 0
        %v533 = vsel %vm371, 1, 0
        %vm534 = vcmp.eq.s32.totalorder %v532, 1
        %vm535 = vcmp.eq.s32.totalorder %v533, 1
        %v536 = vsel %vm534, %v531, 0.0
        %v537 = vsel %vm535, %v530, 0.0
        %538 = vst [vmem:[#allocation2 + $0x70] sm:$0xff] %v536
        %539 = vst [vmem:[#allocation2 + $0x78] sm:$0xff] %v537
        %540 = vrot.lane.b32.xlu0 %v295, 15
        %v541 = vpop.permute.xlu0 %540
        %542 = vrot.lane.b32.xlu0 %v296, 15
        %v543 = vpop.permute.xlu0 %542
        %vm544 = vcmp.lt.s32.totalorder %v298, 15
        %v545 = vsel %vm544, %v541, %v543
        %v546 = vsel %vm544, %v543, %v541
        %v547 = vsel %vm400, 1, 0
        %v548 = vsel %vm401, 1, 0
        %vm549 = vcmp.eq.s32.totalorder %v547, 1
        %vm550 = vcmp.eq.s32.totalorder %v548, 1
        %v551 = vsel %vm549, %v546, 0.0
        %v552 = vsel %vm550, %v545, 0.0
        %553 = vst [vmem:[#allocation2 + $0x80] sm:$0xff] %v551
        %554 = vst [vmem:[#allocation2 + $0x88] sm:$0xff] %v552
        %555 = vrot.lane.b32.xlu0 %v295, 14
        %v556 = vpop.permute.xlu0 %555
        %557 = vrot.lane.b32.xlu0 %v296, 14
        %v558 = vpop.permute.xlu0 %557
        %vm559 = vcmp.lt.s32.totalorder %v298, 14
        %v560 = vsel %vm559, %v556, %v558
        %v561 = vsel %vm559, %v558, %v556
        %v562 = vsel %vm402, 1, 0
        %v563 = vsel %vm403, 1, 0
        %vm564 = vcmp.eq.s32.totalorder %v562, 1
        %vm565 = vcmp.eq.s32.totalorder %v563, 1
        %v566 = vsel %vm564, %v561, 0.0
        %v567 = vsel %vm565, %v560, 0.0
        %568 = vst [vmem:[#allocation2 + $0x90] sm:$0xff] %v566
        %569 = vst [vmem:[#allocation2 + $0x98] sm:$0xff] %v567
        %570 = vrot.lane.b32.xlu0 %v295, 2
        %v571 = vpop.permute.xlu0 %570
        %572 = vrot.lane.b32.xlu0 %v296, 2
        %v573 = vpop.permute.xlu0 %572
        %vm574 = vcmp.lt.s32.totalorder %v298, 2
        %v575 = vsel %vm574, %v571, %v573
        %v576 = vsel %vm574, %v573, %v571
        %v577 = vsel %vm330, 1, 0
        %v578 = vsel %vm331, 1, 0
        %vm579 = vcmp.eq.s32.totalorder %v577, 1
        %vm580 = vcmp.eq.s32.totalorder %v578, 1
        %v581 = vsel %vm579, %v576, 0.0
        %v582 = vsel %vm580, %v575, 0.0
        %583 = vst [vmem:[#allocation2 + $0xa0] sm:$0xff] %v581
        %584 = vst [vmem:[#allocation2 + $0xa8] sm:$0xff] %v582
        %585 = vrot.lane.b32.xlu0 %v295, 1
        %v586 = vpop.permute.xlu0 %585
        %587 = vrot.lane.b32.xlu0 %v296, 1
        %v588 = vpop.permute.xlu0 %587
        %vm589 = vcmp.lt.s32.totalorder %v298, 1
        %v590 = vsel %vm589, %v586, %v588
        %v591 = vsel %vm589, %v588, %v586
        %v592 = vsel %vm338, 1, 0
        %v593 = vsel %vm339, 1, 0
        %vm594 = vcmp.eq.s32.totalorder %v592, 1
        %vm595 = vcmp.eq.s32.totalorder %v593, 1
        %v596 = vsel %vm594, %v591, 0.0
        %v597 = vsel %vm595, %v590, 0.0
        %598 = vst [vmem:[#allocation2 + $0xb0] sm:$0xff] %v596
        %599 = vst [vmem:[#allocation2 + $0xb8] sm:$0xff] %v597
        %600 = vst [vmem:[#allocation2 + $0xc0] sm:$0xff] %v295
        %601 = vst [vmem:[#allocation2 + $0xc8] sm:$0xff] %v296
        %602 = vrot.lane.b32.xlu0 %v295, 127
        %v603 = vpop.permute.xlu0 %602
        %604 = vrot.lane.b32.xlu0 %v296, 127
        %v605 = vpop.permute.xlu0 %604
        %vm606 = vcmp.lt.s32.totalorder %v298, 127
        %v607 = vsel %vm606, %v603, %v605
        %v608 = vsel %vm606, %v605, %v603
        %v609 = vsel %vm346, 1, 0
        %v610 = vsel %vm347, 1, 0
        %vm611 = vcmp.eq.s32.totalorder %v609, 1
        %vm612 = vcmp.eq.s32.totalorder %v610, 1
        %v613 = vsel %vm611, %v607, 0.0
        %v614 = vsel %vm612, %v608, 0.0
        %615 = vst [vmem:[#allocation2 + $0xd0] sm:$0xff] %v613
        %616 = vst [vmem:[#allocation2 + $0xd8] sm:$0xff] %v614
        %617 = vrot.lane.b32.xlu0 %v295, 126
        %v618 = vpop.permute.xlu0 %617
        %619 = vrot.lane.b32.xlu0 %v296, 126
        %v620 = vpop.permute.xlu0 %619
        %vm621 = vcmp.lt.s32.totalorder %v298, 126
        %v622 = vsel %vm621, %v618, %v620
        %v623 = vsel %vm621, %v620, %v618
        %v624 = vsel %vm354, 1, 0
        %v625 = vsel %vm355, 1, 0
        %vm626 = vcmp.eq.s32.totalorder %v624, 1
        %vm627 = vcmp.eq.s32.totalorder %v625, 1
        %v628 = vsel %vm626, %v622, 0.0
        %v629 = vsel %vm627, %v623, 0.0
        %630 = vst [vmem:[#allocation2 + $0xe0] sm:$0xff] %v628
        %631 = vst [vmem:[#allocation2 + $0xe8] sm:$0xff] %v629
        %632 = vrot.lane.b32.xlu0 %v295, 114
        %v633 = vpop.permute.xlu0 %632
        %634 = vrot.lane.b32.xlu0 %v296, 114
        %v635 = vpop.permute.xlu0 %634
        %vm636 = vcmp.lt.s32.totalorder %v298, 114
        %v637 = vsel %vm636, %v633, %v635
        %v638 = vsel %vm636, %v635, %v633
        %v639 = vsel %vm404, 1, 0
        %v640 = vsel %vm405, 1, 0
        %vm641 = vcmp.eq.s32.totalorder %v639, 1
        %vm642 = vcmp.eq.s32.totalorder %v640, 1
        %v643 = vsel %vm641, %v637, 0.0
        %v644 = vsel %vm642, %v638, 0.0
        %645 = vst [vmem:[#allocation2 + $0xf0] sm:$0xff] %v643
        %646 = vst [vmem:[#allocation2 + $0xf8] sm:$0xff] %v644
        %647 = vrot.lane.b32.xlu0 %v295, 113
        %v648 = vpop.permute.xlu0 %647
        %649 = vrot.lane.b32.xlu0 %v296, 113
        %v650 = vpop.permute.xlu0 %649
        %vm651 = vcmp.lt.s32.totalorder %v298, 113
        %v652 = vsel %vm651, %v648, %v650
        %v653 = vsel %vm651, %v650, %v648
        %v654 = vsel %vm406, 1, 0
        %v655 = vsel %vm407, 1, 0
        %vm656 = vcmp.eq.s32.totalorder %v654, 1
        %vm657 = vcmp.eq.s32.totalorder %v655, 1
        %v658 = vsel %vm656, %v652, 0.0
        %v659 = vsel %vm657, %v653, 0.0
        %660 = vst [vmem:[#allocation2 + $0x100] sm:$0xff] %v658
        %661 = vst [vmem:[#allocation2 + $0x108] sm:$0xff] %v659
        %662 = vrot.lane.b32.xlu0 %v295, 112
        %v663 = vpop.permute.xlu0 %662
        %664 = vrot.lane.b32.xlu0 %v296, 112
        %v665 = vpop.permute.xlu0 %664
        %vm666 = vcmp.lt.s32.totalorder %v298, 112
        %v667 = vsel %vm666, %v663, %v665
        %v668 = vsel %vm666, %v665, %v663
        %v669 = vsel %vm378, 1, 0
        %v670 = vsel %vm379, 1, 0
        %vm671 = vcmp.eq.s32.totalorder %v669, 1
        %vm672 = vcmp.eq.s32.totalorder %v670, 1
        %v673 = vsel %vm671, %v667, 0.0
        %v674 = vsel %vm672, %v668, 0.0
        %675 = vst [vmem:[#allocation2 + $0x110] sm:$0xff] %v673
        %676 = vst [vmem:[#allocation2 + $0x118] sm:$0xff] %v674
        %677 = vrot.lane.b32.xlu0 %v295, 111
        %v678 = vpop.permute.xlu0 %677
        %679 = vrot.lane.b32.xlu0 %v296, 111
        %v680 = vpop.permute.xlu0 %679
        %vm681 = vcmp.lt.s32.totalorder %v298, 111
        %v682 = vsel %vm681, %v678, %v680
        %v683 = vsel %vm681, %v680, %v678
        %v684 = vsel %vm408, 1, 0
        %v685 = vsel %vm409, 1, 0
        %vm686 = vcmp.eq.s32.totalorder %v684, 1
        %vm687 = vcmp.eq.s32.totalorder %v685, 1
        %v688 = vsel %vm686, %v682, 0.0
        %v689 = vsel %vm687, %v683, 0.0
        %690 = vst [vmem:[#allocation2 + $0x120] sm:$0xff] %v688
        %691 = vst [vmem:[#allocation2 + $0x128] sm:$0xff] %v689
        %692 = vrot.lane.b32.xlu0 %v295, 110
        %v693 = vpop.permute.xlu0 %692
        %694 = vrot.lane.b32.xlu0 %v296, 110
        %v695 = vpop.permute.xlu0 %694
        %vm696 = vcmp.lt.s32.totalorder %v298, 110
        %v697 = vsel %vm696, %v693, %v695
        %v698 = vsel %vm696, %v695, %v693
        %v699 = vsel %vm410, 1, 0
        %v700 = vsel %vm411, 1, 0
        %vm701 = vcmp.eq.s32.totalorder %v699, 1
        %vm702 = vcmp.eq.s32.totalorder %v700, 1
        %v703 = vsel %vm701, %v697, 0.0
        %v704 = vsel %vm702, %v698, 0.0
        %705 = vst [vmem:[#allocation2 + $0x130] sm:$0xff] %v703
        %706 = vst [vmem:[#allocation2 + $0x138] sm:$0xff] %v704
        %707 = vrot.lane.b32.xlu0 %v295, 98
        %v708 = vpop.permute.xlu0 %707
        %709 = vrot.lane.b32.xlu0 %v296, 98
        %v710 = vpop.permute.xlu0 %709
        %vm711 = vcmp.lt.s32.totalorder %v298, 98
        %v712 = vsel %vm711, %v708, %v710
        %v713 = vsel %vm711, %v710, %v708
        %v714 = vsel %vm412, 1, 0
        %v715 = vsel %vm413, 1, 0
        %vm716 = vcmp.eq.s32.totalorder %v714, 1
        %vm717 = vcmp.eq.s32.totalorder %v715, 1
        %v718 = vsel %vm716, %v712, 0.0
        %v719 = vsel %vm717, %v713, 0.0
        %720 = vst [vmem:[#allocation2 + $0x140] sm:$0xff] %v718
        %721 = vst [vmem:[#allocation2 + $0x148] sm:$0xff] %v719
        %722 = vrot.lane.b32.xlu0 %v295, 97
        %v723 = vpop.permute.xlu0 %722
        %724 = vrot.lane.b32.xlu0 %v296, 97
        %v725 = vpop.permute.xlu0 %724
        %vm726 = vcmp.lt.s32.totalorder %v298, 97
        %v727 = vsel %vm726, %v723, %v725
        %v728 = vsel %vm726, %v725, %v723
        %v729 = vsel %vm414, 1, 0
        %v730 = vsel %vm415, 1, 0
        %vm731 = vcmp.eq.s32.totalorder %v729, 1
        %vm732 = vcmp.eq.s32.totalorder %v730, 1
        %v733 = vsel %vm731, %v727, 0.0
        %v734 = vsel %vm732, %v728, 0.0
        %735 = vst [vmem:[#allocation2 + $0x150] sm:$0xff] %v733
        %736 = vst [vmem:[#allocation2 + $0x158] sm:$0xff] %v734
        %737 = vrot.lane.b32.xlu0 %v295, 96
        %v738 = vpop.permute.xlu0 %737
        %739 = vrot.lane.b32.xlu0 %v296, 96
        %v740 = vpop.permute.xlu0 %739
        %vm741 = vcmp.lt.s32.totalorder %v298, 96
        %v742 = vsel %vm741, %v738, %v740
        %v743 = vsel %vm741, %v740, %v738
        %v744 = vsel %vm386, 1, 0
        %v745 = vsel %vm387, 1, 0
        %vm746 = vcmp.eq.s32.totalorder %v744, 1
        %vm747 = vcmp.eq.s32.totalorder %v745, 1
        %v748 = vsel %vm746, %v742, 0.0
        %v749 = vsel %vm747, %v743, 0.0
        %750 = vst [vmem:[#allocation2 + $0x160] sm:$0xff] %v748
        %751 = vst [vmem:[#allocation2 + $0x168] sm:$0xff] %v749
        %752 = vrot.lane.b32.xlu0 %v295, 95
        %v753 = vpop.permute.xlu0 %752
        %754 = vrot.lane.b32.xlu0 %v296, 95
        %v755 = vpop.permute.xlu0 %754
        %vm756 = vcmp.lt.s32.totalorder %v298, 95
        %v757 = vsel %vm756, %v753, %v755
        %v758 = vsel %vm756, %v755, %v753
        %v759 = vsel %vm416, 1, 0
        %v760 = vsel %vm417, 1, 0
        %vm761 = vcmp.eq.s32.totalorder %v759, 1
        %vm762 = vcmp.eq.s32.totalorder %v760, 1
        %v763 = vsel %vm761, %v757, 0.0
        %v764 = vsel %vm762, %v758, 0.0
        %765 = vst [vmem:[#allocation2 + $0x170] sm:$0xff] %v763
        %766 = vst [vmem:[#allocation2 + $0x178] sm:$0xff] %v764
        %767 = vrot.lane.b32.xlu0 %v295, 94
        %v768 = vpop.permute.xlu0 %767
        %769 = vrot.lane.b32.xlu0 %v296, 94
        %v770 = vpop.permute.xlu0 %769
        %vm771 = vcmp.lt.s32.totalorder %v298, 94
        %v772 = vsel %vm771, %v768, %v770
        %v773 = vsel %vm771, %v770, %v768
        %v774 = vsel %vm418, 1, 0
        %v775 = vsel %vm419, 1, 0
        %vm776 = vcmp.eq.s32.totalorder %v774, 1
        %vm777 = vcmp.eq.s32.totalorder %v775, 1
        %v778 = vsel %vm776, %v772, 0.0
        %v779 = vsel %vm777, %v773, 0.0
        %780 = vst [vmem:[#allocation2 + $0x180] sm:$0xff] %v778
        %781 = vst [vmem:[#allocation2 + $0x188] sm:$0xff] %v779
        %v782 = vld [vmem:[#allocation2] sm:$0xff]
        %v783 = vld [vmem:[#allocation2 + $0x8] sm:$0xff]
        %v784 = vld [vmem:[#allocation2 + $0x10] sm:$0xff]
        %v785 = vld [vmem:[#allocation2 + $0x18] sm:$0xff]
        %v786 = vld [vmem:[#allocation2 + $0x20] sm:$0xff]
        %v787 = vld [vmem:[#allocation2 + $0x28] sm:$0xff]
        %v788 = vld [vmem:[#allocation2 + $0x30] sm:$0xff]
        %v789 = vld [vmem:[#allocation2 + $0x38] sm:$0xff]
        %v790 = vld [vmem:[#allocation2 + $0x40] sm:$0xff]
        %v791 = vld [vmem:[#allocation2 + $0x48] sm:$0xff]
        %v792 = vld [vmem:[#allocation2 + $0x50] sm:$0xff]
        %v793 = vld [vmem:[#allocation2 + $0x58] sm:$0xff]
        %v794 = vld [vmem:[#allocation2 + $0x60] sm:$0xff]
        %v795 = vld [vmem:[#allocation2 + $0x68] sm:$0xff]
        %v796 = vld [vmem:[#allocation2 + $0x70] sm:$0xff]
        %v797 = vld [vmem:[#allocation2 + $0x78] sm:$0xff]
        %v798 = vld [vmem:[#allocation2 + $0x80] sm:$0xff]
        %v799 = vld [vmem:[#allocation2 + $0x88] sm:$0xff]
        %v800 = vld [vmem:[#allocation2 + $0x90] sm:$0xff]
        %v801 = vld [vmem:[#allocation2 + $0x98] sm:$0xff]
        %v802 = vld [vmem:[#allocation2 + $0xa0] sm:$0xff]
        %v803 = vld [vmem:[#allocation2 + $0xa8] sm:$0xff]
        %v804 = vld [vmem:[#allocation2 + $0xb0] sm:$0xff]
        %v805 = vld [vmem:[#allocation2 + $0xb8] sm:$0xff]
        %v806 = vld [vmem:[#allocation2 + $0xc0] sm:$0xff]
        %v807 = vld [vmem:[#allocation2 + $0xc8] sm:$0xff]
        %v808 = vld [vmem:[#allocation2 + $0xd0] sm:$0xff]
        %v809 = vld [vmem:[#allocation2 + $0xd8] sm:$0xff]
        %v810 = vld [vmem:[#allocation2 + $0xe0] sm:$0xff]
        %v811 = vld [vmem:[#allocation2 + $0xe8] sm:$0xff]
        %v812 = vld [vmem:[#allocation2 + $0xf0] sm:$0xff]
        %v813 = vld [vmem:[#allocation2 + $0xf8] sm:$0xff]
        %v814 = vld [vmem:[#allocation2 + $0x100] sm:$0xff]
        %v815 = vld [vmem:[#allocation2 + $0x108] sm:$0xff]
        %v816 = vld [vmem:[#allocation2 + $0x110] sm:$0xff]
        %v817 = vld [vmem:[#allocation2 + $0x118] sm:$0xff]
        %v818 = vld [vmem:[#allocation2 + $0x120] sm:$0xff]
        %v819 = vld [vmem:[#allocation2 + $0x128] sm:$0xff]
        %v820 = vld [vmem:[#allocation2 + $0x130] sm:$0xff]
        %v821 = vld [vmem:[#allocation2 + $0x138] sm:$0xff]
        %v822 = vld [vmem:[#allocation2 + $0x140] sm:$0xff]
        %v823 = vld [vmem:[#allocation2 + $0x148] sm:$0xff]
        %v824 = vld [vmem:[#allocation2 + $0x150] sm:$0xff]
        %v825 = vld [vmem:[#allocation2 + $0x158] sm:$0xff]
        %v826 = vld [vmem:[#allocation2 + $0x160] sm:$0xff]
        %v827 = vld [vmem:[#allocation2 + $0x168] sm:$0xff]
        %v828 = vld [vmem:[#allocation2 + $0x170] sm:$0xff]
        %v829 = vld [vmem:[#allocation2 + $0x178] sm:$0xff]
        %v830 = vld [vmem:[#allocation2 + $0x180] sm:$0xff]
        %v831 = vld [vmem:[#allocation2 + $0x188] sm:$0xff]
        %v832 = vld [vmem:[%s1] sm:$0xff]
        %v833 = vld [vmem:[%s1 + $0x8] sm:$0xff]
        %v834 = vld [vmem:[%s2] sm:$0xff]
        %836 = vset.pattern.permute.xlu0 0
        %837 = vperm.xlu0 %836, %v834
        %v838 = vpop.permute.xlu0 %837
        %vm840 = vcmask 588800
        %v842 = vsel %vm840, %v833, 0
        %844 = vmatprep.subr.mxu0 %v813
        %845 = vmatpush1.msra.mxu0 %v812
        %846 = vmatprep.subr.mxu0 %v811
        %847 = vmatpush1.msra.mxu0 %v810
        %848 = vmatprep.subr.mxu0 %v809
        %849 = vmatpush1.msra.mxu0 %v808
        %850 = vmatprep.subr.mxu0 %v807
        %851 = vmatpush1.msra.mxu0 %v806
        %852 = vmatprep.subr.mxu0 %v805
        %853 = vmatpush1.msra.mxu0 %v804
        %854 = vmatprep.subr.mxu0 %v803
        %855 = vmatpush1.msra.mxu0 %v802
        %856 = vmatprep.subr.mxu0 %v801
        %857 = vmatpush1.msra.mxu0 %v800
        %858 = vmatprep.subr.mxu0 %v799
        %859 = vmatpush1.msra.mxu0 %v798
        %860 = vmatprep.subr.mxu0 %v797
        %861 = vmatpush1.msra.mxu0 %v796
        %862 = vmatprep.subr.mxu0 %v795
        %863 = vmatpush1.msra.mxu0 %v794
        %864 = vmatprep.subr.mxu0 %v793
        %865 = vmatpush1.msra.mxu0 %v792
        %866 = vmatprep.subr.mxu0 %v791
        %867 = vmatpush1.msra.mxu0 %v790
        %868 = vmatprep.subr.mxu0 %v789
        %869 = vmatpush1.msra.mxu0 %v788
        %870 = vmatprep.subr.mxu0 %v787
        %871 = vmatpush1.msra.mxu0 %v786
        %872 = vmatprep.subr.mxu0 %v785
        %873 = vmatpush1.msra.mxu0 %v784
        %874 = vmatprep.subr.mxu0 %v783
        %875 = vmatpush1.msra.mxu0 %v782
        %876 = vmatprep.subr.mxu0 0.0
        %877 = vmatpush2.msra.mxu0 0.0
        %878 = vmatprep.subr.mxu0 0.0
        %879 = vmatpush2.msra.mxu0 0.0
        %880 = vmatprep.subr.mxu0 0.0
        %881 = vmatpush2.msra.mxu0 0.0
        %882 = vmatprep.subr.mxu0 0.0
        %883 = vmatpush2.msra.mxu0 0.0
        %884 = vmatprep.subr.mxu0 0.0
        %885 = vmatpush2.msra.mxu0 0.0
        %886 = vmatprep.subr.mxu0 0.0
        %887 = vmatpush2.msra.mxu0 0.0
        %888 = vmatprep.subr.mxu0 0.0
        %889 = vmatpush2.msra.mxu0 0.0
        %890 = vmatprep.subr.mxu0 %v831
        %891 = vmatpush2.msra.mxu0 %v830
        %892 = vmatprep.subr.mxu0 %v829
        %893 = vmatpush2.msra.mxu0 %v828
        %894 = vmatprep.subr.mxu0 %v827
        %895 = vmatpush2.msra.mxu0 %v826
        %896 = vmatprep.subr.mxu0 %v825
        %897 = vmatpush2.msra.mxu0 %v824
        %898 = vmatprep.subr.mxu0 %v823
        %899 = vmatpush2.msra.mxu0 %v822
        %900 = vmatprep.subr.mxu0 %v821
        %901 = vmatpush2.msra.mxu0 %v820
        %902 = vmatprep.subr.mxu0 %v819
        %903 = vmatpush2.msra.mxu0 %v818
        %904 = vmatprep.subr.mxu0 %v817
        %905 = vmatpush2.msra.mxu0 %v816
        %906 = vmatprep.subr.mxu0 %v815
        %907 = vmatpush2.msra.mxu0 %v814
        %908 = vmatprep.mubr.f32.mxu0 %v842
        %909 = vmatmul.mubr.f32.gmra.mxu0 %v832
        %v910 = vpop.f32.mrf.mxu0
        %v911 = vadd.f32 %v838, %v910
        %v912 = vpop.f32.mrf.mxu0
        %v913 = vadd.f32 %v838, %v912
        %914 = vdwg.mxu0
        %915 = vst [vmem:[#allocation2] sm:$0xff] %v521
        %916 = vst [vmem:[#allocation2 + $0x8] sm:$0xff] %v522
        %917 = vst [vmem:[#allocation2 + $0x10] sm:$0xff] %v536
        %918 = vst [vmem:[#allocation2 + $0x18] sm:$0xff] %v537
        %919 = vst [vmem:[#allocation2 + $0x20] sm:$0xff] %v551
        %920 = vst [vmem:[#allocation2 + $0x28] sm:$0xff] %v552
        %921 = vst [vmem:[#allocation2 + $0x30] sm:$0xff] %v596
        %922 = vst [vmem:[#allocation2 + $0x38] sm:$0xff] %v597
        %923 = vst [vmem:[#allocation2 + $0x40] sm:$0xff] %v295
        %924 = vst [vmem:[#allocation2 + $0x48] sm:$0xff] %v296
        %925 = vst [vmem:[#allocation2 + $0x50] sm:$0xff] %v613
        %926 = vst [vmem:[#allocation2 + $0x58] sm:$0xff] %v614
        %927 = vst [vmem:[#allocation2 + $0x60] sm:$0xff] %v658
        %928 = vst [vmem:[#allocation2 + $0x68] sm:$0xff] %v659
        %929 = vst [vmem:[#allocation2 + $0x70] sm:$0xff] %v673
        %930 = vst [vmem:[#allocation2 + $0x78] sm:$0xff] %v674
        %931 = vst [vmem:[#allocation2 + $0x80] sm:$0xff] %v688
        %932 = vst [vmem:[#allocation2 + $0x88] sm:$0xff] %v689
        %v933 = vld [vmem:[#allocation2] sm:$0xff]
        %v934 = vld [vmem:[#allocation2 + $0x8] sm:$0xff]
        %v935 = vld [vmem:[#allocation2 + $0x10] sm:$0xff]
        %v936 = vld [vmem:[#allocation2 + $0x18] sm:$0xff]
        %v937 = vld [vmem:[#allocation2 + $0x20] sm:$0xff]
        %v938 = vld [vmem:[#allocation2 + $0x28] sm:$0xff]
        %v939 = vld [vmem:[#allocation2 + $0x30] sm:$0xff]
        %v940 = vld [vmem:[#allocation2 + $0x38] sm:$0xff]
        %v941 = vld [vmem:[#allocation2 + $0x40] sm:$0xff]
        %v942 = vld [vmem:[#allocation2 + $0x48] sm:$0xff]
        %v943 = vld [vmem:[#allocation2 + $0x50] sm:$0xff]
        %v944 = vld [vmem:[#allocation2 + $0x58] sm:$0xff]
        %v945 = vld [vmem:[#allocation2 + $0x60] sm:$0xff]
        %v946 = vld [vmem:[#allocation2 + $0x68] sm:$0xff]
        %v947 = vld [vmem:[#allocation2 + $0x70] sm:$0xff]
        %v948 = vld [vmem:[#allocation2 + $0x78] sm:$0xff]
        %v949 = vld [vmem:[#allocation2 + $0x80] sm:$0xff]
        %v950 = vld [vmem:[#allocation2 + $0x88] sm:$0xff]
        %v951 = vld [vmem:[%s3] sm:$0xff]
        %v952 = vld [vmem:[%s4] sm:$0xff]
        %954 = vset.pattern.permute.xlu0 0
        %955 = vperm.xlu0 %954, %v952
        %v956 = vpop.permute.xlu0 %955
        %v959 = vsel %vm840, %v951, 0
        %961 = vmatprep.subr.mxu0 0.0
        %962 = vmatpush1.msra.mxu0 0.0
        %963 = vmatprep.subr.mxu0 0.0
        %964 = vmatpush1.msra.mxu0 0.0
        %965 = vmatprep.subr.mxu0 0.0
        %966 = vmatpush1.msra.mxu0 0.0
        %967 = vmatprep.subr.mxu0 0.0
        %968 = vmatpush1.msra.mxu0 0.0
        %969 = vmatprep.subr.mxu0 0.0
        %970 = vmatpush1.msra.mxu0 0.0
        %971 = vmatprep.subr.mxu0 0.0
        %972 = vmatpush1.msra.mxu0 0.0
        %973 = vmatprep.subr.mxu0 0.0
        %974 = vmatpush1.msra.mxu0 0.0
        %975 = vmatprep.subr.mxu0 %v950
        %976 = vmatpush1.msra.mxu0 %v949
        %977 = vmatprep.subr.mxu0 %v948
        %978 = vmatpush1.msra.mxu0 %v947
        %979 = vmatprep.subr.mxu0 %v946
        %980 = vmatpush1.msra.mxu0 %v945
        %981 = vmatprep.subr.mxu0 %v944
        %982 = vmatpush1.msra.mxu0 %v943
        %983 = vmatprep.subr.mxu0 %v942
        %984 = vmatpush1.msra.mxu0 %v941
        %985 = vmatprep.subr.mxu0 %v940
        %986 = vmatpush1.msra.mxu0 %v939
        %987 = vmatprep.subr.mxu0 %v938
        %988 = vmatpush1.msra.mxu0 %v937
        %989 = vmatprep.subr.mxu0 %v936
        %990 = vmatpush1.msra.mxu0 %v935
        %991 = vmatprep.subr.mxu0 %v934
        %992 = vmatpush1.msra.mxu0 %v933
        %993 = vmatprep.subr.mxu0 0.0
        %994 = vmatpush2.msra.mxu0 0.0
        %995 = vmatprep.subr.mxu0 0.0
        %996 = vmatpush2.msra.mxu0 0.0
        %997 = vmatprep.subr.mxu0 0.0
        %998 = vmatpush2.msra.mxu0 0.0
        %999 = vmatprep.subr.mxu0 0.0
        %1000 = vmatpush2.msra.mxu0 0.0
        %1001 = vmatprep.subr.mxu0 0.0
        %1002 = vmatpush2.msra.mxu0 0.0
        %1003 = vmatprep.subr.mxu0 0.0
        %1004 = vmatpush2.msra.mxu0 0.0
        %1005 = vmatprep.subr.mxu0 0.0
        %1006 = vmatpush2.msra.mxu0 0.0
        %1007 = vmatprep.subr.mxu0 0.0
        %1008 = vmatpush2.msra.mxu0 0.0
        %1009 = vmatprep.subr.mxu0 0.0
        %1010 = vmatpush2.msra.mxu0 0.0
        %1011 = vmatprep.subr.mxu0 0.0
        %1012 = vmatpush2.msra.mxu0 0.0
        %1013 = vmatprep.subr.mxu0 0.0
        %1014 = vmatpush2.msra.mxu0 0.0
        %1015 = vmatprep.subr.mxu0 0.0
        %1016 = vmatpush2.msra.mxu0 0.0
        %1017 = vmatprep.subr.mxu0 0.0
        %1018 = vmatpush2.msra.mxu0 0.0
        %1019 = vmatprep.subr.mxu0 0.0
        %1020 = vmatpush2.msra.mxu0 0.0
        %1021 = vmatprep.subr.mxu0 0.0
        %1022 = vmatpush2.msra.mxu0 0.0
        %1023 = vmatprep.subr.mxu0 0.0
        %1024 = vmatpush2.msra.mxu0 0.0
        %1025 = vmatprep.mubr.f32.mxu0 0.0
        %1026 = vmatmul.mubr.f32.gmra.mxu0 %v959
        %v1027 = vpop.f32.mrf.mxu0
        %v1028 = vadd.f32 %v956, %v1027
        %v1029 = vpop.f32.mrf.mxu0
        %v1030 = vadd.f32 %v956, %v1029
        %1031 = vdwg.mxu0
        %vm1032 = vcmp.gt.f32.partialorder %v1028, 0.0
        %vm1033 = vcmp.gt.f32.partialorder %v1030, 0.0
        %v1034 = vmul.f32 %v1028, 0.01
        %v1035 = vmul.f32 %v1030, 0.01
        %v1036 = vsel %vm1032, %v1028, %v1034
        %v1037 = vsel %vm1033, %v1030, %v1035
        %1038 = vrot.lane.b32.xlu0 %v1036, 17
        %v1039 = vpop.permute.xlu0 %1038
        %1040 = vrot.lane.b32.xlu0 %v1037, 17
        %v1041 = vpop.permute.xlu0 %1040
        %v1042 = vsel %vm514, %v1039, %v1041
        %v1043 = vsel %vm514, %v1041, %v1039
        %v1044 = vsel %vm519, %v1043, 0.0
        %v1045 = vsel %vm520, %v1042, 0.0
        %1046 = vst [vmem:[#allocation2] sm:$0xff] %v1044
        %1047 = vst [vmem:[#allocation2 + $0x8] sm:$0xff] %v1045
        %1048 = vrot.lane.b32.xlu0 %v1036, 16
        %v1049 = vpop.permute.xlu0 %1048
        %1050 = vrot.lane.b32.xlu0 %v1037, 16
        %v1051 = vpop.permute.xlu0 %1050
        %v1052 = vsel %vm529, %v1049, %v1051
        %v1053 = vsel %vm529, %v1051, %v1049
        %v1054 = vsel %vm534, %v1053, 0.0
        %v1055 = vsel %vm535, %v1052, 0.0
        %1056 = vst [vmem:[#allocation2 + $0x10] sm:$0xff] %v1054
        %1057 = vst [vmem:[#allocation2 + $0x18] sm:$0xff] %v1055
        %1058 = vrot.lane.b32.xlu0 %v1036, 15
        %v1059 = vpop.permute.xlu0 %1058
        %1060 = vrot.lane.b32.xlu0 %v1037, 15
        %v1061 = vpop.permute.xlu0 %1060
        %v1062 = vsel %vm544, %v1059, %v1061
        %v1063 = vsel %vm544, %v1061, %v1059
        %v1064 = vsel %vm549, %v1063, 0.0
        %v1065 = vsel %vm550, %v1062, 0.0
        %1066 = vst [vmem:[#allocation2 + $0x20] sm:$0xff] %v1064
        %1067 = vst [vmem:[#allocation2 + $0x28] sm:$0xff] %v1065
        %1068 = vrot.lane.b32.xlu0 %v1036, 1
        %v1069 = vpop.permute.xlu0 %1068
        %1070 = vrot.lane.b32.xlu0 %v1037, 1
        %v1071 = vpop.permute.xlu0 %1070
        %v1072 = vsel %vm589, %v1069, %v1071
        %v1073 = vsel %vm589, %v1071, %v1069
        %v1074 = vsel %vm594, %v1073, 0.0
        %v1075 = vsel %vm595, %v1072, 0.0
        %1076 = vst [vmem:[#allocation2 + $0x30] sm:$0xff] %v1074
        %1077 = vst [vmem:[#allocation2 + $0x38] sm:$0xff] %v1075
        %1078 = vst [vmem:[#allocation2 + $0x40] sm:$0xff] %v1036
        %1079 = vst [vmem:[#allocation2 + $0x48] sm:$0xff] %v1037
        %1080 = vrot.lane.b32.xlu0 %v1036, 127
        %v1081 = vpop.permute.xlu0 %1080
        %1082 = vrot.lane.b32.xlu0 %v1037, 127
        %v1083 = vpop.permute.xlu0 %1082
        %v1084 = vsel %vm606, %v1081, %v1083
        %v1085 = vsel %vm606, %v1083, %v1081
        %v1086 = vsel %vm611, %v1084, 0.0
        %v1087 = vsel %vm612, %v1085, 0.0
        %1088 = vst [vmem:[#allocation2 + $0x50] sm:$0xff] %v1086
        %1089 = vst [vmem:[#allocation2 + $0x58] sm:$0xff] %v1087
        %1090 = vrot.lane.b32.xlu0 %v1036, 113
        %v1091 = vpop.permute.xlu0 %1090
        %1092 = vrot.lane.b32.xlu0 %v1037, 113
        %v1093 = vpop.permute.xlu0 %1092
        %v1094 = vsel %vm651, %v1091, %v1093
        %v1095 = vsel %vm651, %v1093, %v1091
        %v1096 = vsel %vm656, %v1094, 0.0
        %v1097 = vsel %vm657, %v1095, 0.0
        %1098 = vst [vmem:[#allocation2 + $0x60] sm:$0xff] %v1096
        %1099 = vst [vmem:[#allocation2 + $0x68] sm:$0xff] %v1097
        %1100 = vrot.lane.b32.xlu0 %v1036, 112
        %v1101 = vpop.permute.xlu0 %1100
        %1102 = vrot.lane.b32.xlu0 %v1037, 112
        %v1103 = vpop.permute.xlu0 %1102
        %v1104 = vsel %vm666, %v1101, %v1103
        %v1105 = vsel %vm666, %v1103, %v1101
        %v1106 = vsel %vm671, %v1104, 0.0
        %v1107 = vsel %vm672, %v1105, 0.0
        %1108 = vst [vmem:[#allocation2 + $0x70] sm:$0xff] %v1106
        %1109 = vst [vmem:[#allocation2 + $0x78] sm:$0xff] %v1107
        %1110 = vrot.lane.b32.xlu0 %v1036, 111
        %v1111 = vpop.permute.xlu0 %1110
        %1112 = vrot.lane.b32.xlu0 %v1037, 111
        %v1113 = vpop.permute.xlu0 %1112
        %v1114 = vsel %vm681, %v1111, %v1113
        %v1115 = vsel %vm681, %v1113, %v1111
        %v1116 = vsel %vm686, %v1114, 0.0
        %v1117 = vsel %vm687, %v1115, 0.0
        %1118 = vst [vmem:[#allocation2 + $0x80] sm:$0xff] %v1116
        %1119 = vst [vmem:[#allocation2 + $0x88] sm:$0xff] %v1117
        %v1120 = vld [vmem:[#allocation2] sm:$0xff]
        %v1121 = vld [vmem:[#allocation2 + $0x8] sm:$0xff]
        %v1122 = vld [vmem:[#allocation2 + $0x10] sm:$0xff]
        %v1123 = vld [vmem:[#allocation2 + $0x18] sm:$0xff]
        %v1124 = vld [vmem:[#allocation2 + $0x20] sm:$0xff]
        %v1125 = vld [vmem:[#allocation2 + $0x28] sm:$0xff]
        %v1126 = vld [vmem:[#allocation2 + $0x30] sm:$0xff]
        %v1127 = vld [vmem:[#allocation2 + $0x38] sm:$0xff]
        %v1128 = vld [vmem:[#allocation2 + $0x40] sm:$0xff]
        %v1129 = vld [vmem:[#allocation2 + $0x48] sm:$0xff]
        %v1130 = vld [vmem:[#allocation2 + $0x50] sm:$0xff]
        %v1131 = vld [vmem:[#allocation2 + $0x58] sm:$0xff]
        %v1132 = vld [vmem:[#allocation2 + $0x60] sm:$0xff]
        %v1133 = vld [vmem:[#allocation2 + $0x68] sm:$0xff]
        %v1134 = vld [vmem:[#allocation2 + $0x70] sm:$0xff]
        %v1135 = vld [vmem:[#allocation2 + $0x78] sm:$0xff]
        %v1136 = vld [vmem:[#allocation2 + $0x80] sm:$0xff]
        %v1137 = vld [vmem:[#allocation2 + $0x88] sm:$0xff]
        %v1138 = vld [vmem:[%s5] sm:$0xff]
        %v1139 = vld [vmem:[%s6] sm:$0xff]
        %1141 = vset.pattern.permute.xlu0 0
        %1142 = vperm.xlu0 %1141, %v1139
        %v1143 = vpop.permute.xlu0 %1142
        %v1146 = vsel %vm840, %v1138, 0
        %1148 = vmatprep.subr.mxu0 0.0
        %1149 = vmatpush1.msra.mxu0 0.0
        %1150 = vmatprep.subr.mxu0 0.0
        %1151 = vmatpush1.msra.mxu0 0.0
        %1152 = vmatprep.subr.mxu0 0.0
        %1153 = vmatpush1.msra.mxu0 0.0
        %1154 = vmatprep.subr.mxu0 0.0
        %1155 = vmatpush1.msra.mxu0 0.0
        %1156 = vmatprep.subr.mxu0 0.0
        %1157 = vmatpush1.msra.mxu0 0.0
        %1158 = vmatprep.subr.mxu0 0.0
        %1159 = vmatpush1.msra.mxu0 0.0
        %1160 = vmatprep.subr.mxu0 0.0
        %1161 = vmatpush1.msra.mxu0 0.0
        %1162 = vmatprep.subr.mxu0 %v1137
        %1163 = vmatpush1.msra.mxu0 %v1136
        %1164 = vmatprep.subr.mxu0 %v1135
        %1165 = vmatpush1.msra.mxu0 %v1134
        %1166 = vmatprep.subr.mxu0 %v1133
        %1167 = vmatpush1.msra.mxu0 %v1132
        %1168 = vmatprep.subr.mxu0 %v1131
        %1169 = vmatpush1.msra.mxu0 %v1130
        %1170 = vmatprep.subr.mxu0 %v1129
        %1171 = vmatpush1.msra.mxu0 %v1128
        %1172 = vmatprep.subr.mxu0 %v1127
        %1173 = vmatpush1.msra.mxu0 %v1126
        %1174 = vmatprep.subr.mxu0 %v1125
        %1175 = vmatpush1.msra.mxu0 %v1124
        %1176 = vmatprep.subr.mxu0 %v1123
        %1177 = vmatpush1.msra.mxu0 %v1122
        %1178 = vmatprep.subr.mxu0 %v1121
        %1179 = vmatpush1.msra.mxu0 %v1120
        %1180 = vmatprep.subr.mxu0 0.0
        %1181 = vmatpush2.msra.mxu0 0.0
        %1182 = vmatprep.subr.mxu0 0.0
        %1183 = vmatpush2.msra.mxu0 0.0
        %1184 = vmatprep.subr.mxu0 0.0
        %1185 = vmatpush2.msra.mxu0 0.0
        %1186 = vmatprep.subr.mxu0 0.0
        %1187 = vmatpush2.msra.mxu0 0.0
        %1188 = vmatprep.subr.mxu0 0.0
        %1189 = vmatpush2.msra.mxu0 0.0
        %1190 = vmatprep.subr.mxu0 0.0
        %1191 = vmatpush2.msra.mxu0 0.0
        %1192 = vmatprep.subr.mxu0 0.0
        %1193 = vmatpush2.msra.mxu0 0.0
        %1194 = vmatprep.subr.mxu0 0.0
        %1195 = vmatpush2.msra.mxu0 0.0
        %1196 = vmatprep.subr.mxu0 0.0
        %1197 = vmatpush2.msra.mxu0 0.0
        %1198 = vmatprep.subr.mxu0 0.0
        %1199 = vmatpush2.msra.mxu0 0.0
        %1200 = vmatprep.subr.mxu0 0.0
        %1201 = vmatpush2.msra.mxu0 0.0
        %1202 = vmatprep.subr.mxu0 0.0
        %1203 = vmatpush2.msra.mxu0 0.0
        %1204 = vmatprep.subr.mxu0 0.0
        %1205 = vmatpush2.msra.mxu0 0.0
        %1206 = vmatprep.subr.mxu0 0.0
        %1207 = vmatpush2.msra.mxu0 0.0
        %1208 = vmatprep.subr.mxu0 0.0
        %1209 = vmatpush2.msra.mxu0 0.0
        %1210 = vmatprep.subr.mxu0 0.0
        %1211 = vmatpush2.msra.mxu0 0.0
        %1212 = vmatprep.mubr.f32.mxu0 0.0
        %1213 = vmatmul.mubr.f32.gmra.mxu0 %v1146
        %v1214 = vpop.f32.mrf.mxu0
        %v1215 = vadd.f32 %v1143, %v1214
        %v1216 = vpop.f32.mrf.mxu0
        %v1217 = vadd.f32 %v1143, %v1216
        %1218 = vdwg.mxu0
        %v1219 = vxor.u32 %v1215, 2147483648
        %v1220 = vxor.u32 %v1217, 2147483648
        %v1221 = vmul.f32 %v1219, 1.442695
        %v1222 = vpow.pop %v1221
        %v1223 = vmul.f32 %v1220, 1.442695
        %v1224 = vpow.pop %v1223
        %v1225 = vadd.f32 %v1222, 1.0
        %v1226 = vadd.f32 %v1224, 1.0
        %v1227 = vrcp.pop %v1225
        %v1228 = vmul.f32 1.0, %v1227
        %v1229 = vrcp.pop %v1226
        %v1230 = vmul.f32 1.0, %v1229
        %v1231 = vmul.f32 %v911, %v1228
        %v1232 = vmul.f32 %v913, %v1230
        %v1233 = vadd.f32 %v1231, %v295
        %v1234 = vadd.f32 %v1232, %v296
        %1235 = vst [vmem:[%s294] sm:$0xff] %v1233
        %1236 = vst [vmem:[%s294 + $0x8] sm:$0xff] %v1234
        %s1237 = sand.u32 %s184, 1
        %s1238 = scalar_lea.sflag [#allocation5], %s1237
        %s1239 = sand.u32 %s184, 1
        %s1240 = smul.addr %s1239, 16
        %s1241 = scalar_lea.vmem [#allocation6], %s1240
        // Predicated region
        $region53: #{tpu_custom_call.1} parent=47 // pred_check
          %p1242 = pneg %p194
        $region54: #{tpu_custom_call.1} parent=47 // pred_check_branch
          %1244 = sbr.rel (%p1242) target = $region56
        $region55: #{tpu_custom_call.1} parent=47 // pred_region
          %s1246 = ssub.s32 256, 256
          %1247 = vsyncadd %s1238, %s1246
          %s1248 = smul.addr %s24, 2
          %s1249 = smul.addr %s1248, 128
          %s1250 = scalar_lea.hbm %s7, %s1249
          %s1252 = sshll.u32 %s1241, 4
          %s1253 = int_to_ptr.vmem [resolvable:$true] %s1252
          %1255 = dma.vmem_to_hbm [thread:$0]  %s1253, 256, %s1250, %s1238
        $region56: #{tpu_custom_call.1} parent=47 // pred_fallthru
          _
      $region48: #{tpu_custom_call.1} parent=5 // pred_fallthru
        _
      %p1256 = scmp.le.s32.totalorder 2, %s19
      // Predicated region
      $region57: #{tpu_custom_call.1} parent=5 // pred_check
        %p1257 = pneg %p1256
      $region58: #{tpu_custom_call.1} parent=5 // pred_check_branch
        %1259 = sbr.rel (%p1257) target = $region60
      $region59: #{tpu_custom_call.1} parent=5 // pred_region
        %s1260 = ssub.s32 %s19, 2
        // Predicated region
        $region61: #{tpu_custom_call.1} parent=59 // pred_check
          %p1261 = pneg %p200
        $region62: #{tpu_custom_call.1} parent=59 // pred_check_branch
          %1263 = sbr.rel (%p1261) target = $region64
        $region63: #{tpu_custom_call.1} parent=59 // pred_region
          %s1264 = sand.u32 %s185, 1
          %s1265 = scalar_lea.sflag [#allocation5], %s1264
          %s1266 = sand.u32 %s185, 1
          %s1267 = smul.addr %s1266, 16
          %s1268 = scalar_lea.vmem [#allocation6], %s1267
          %1269 = dma.done %s1265, 256
        $region64: #{tpu_custom_call.1} parent=59 // pred_fallthru
          _
      $region60: #{tpu_custom_call.1} parent=5 // pred_fallthru
        _
    $region6: #{tpu_custom_call.1} parent=1 // loop_footer
      %s23 = sadd.s32 1, %s19
    $region7: #{tpu_custom_call.1} parent=1 // loop_footer_branch
      %18 = sbr.rel target = $region3
    $region8: #{tpu_custom_call.1} parent=1 // loop_exit
      _
    %1270 = vsyncpa [#allocation4], 1
    %s1271 = scalar_lea.sflag [#allocation4], 1
    %1272 = vsyncpa %s1271, 1
    %1273 = vsyncpa [#allocation5], 1
    %s1274 = scalar_lea.sflag [#allocation5], 1
    %1275 = vsyncpa %s1274, 1

</llo_original>
